<compile_context>
chip_gen: v7x
topology: tpu7x:2x2x1
jax: 0.10.0
libtpu: 0.0.40
codegen_flags: <defaults>
</compile_context>

<pallas_src>
import functools

import jax
import jax.numpy as jnp
from jax.experimental import pallas as pl
from jax.experimental.pallas import tpu as pltpu


CPAD = 8                       # every channel dim padded to 8 (max real = 8)
KH = KW = 3                    # 3x3 convolutions
NTAPS = KH * KW                # 9 taps
KDIM = NTAPS * CPAD            # 72: im2col contraction for the 8-channel convs
K1DIM = 2 * CPAD               # 16: conv1 contraction (9 taps x 1 in-ch, padded)
# Tap order MUST match the weight packing in _pack_params (ky-major, kx-minor).
OFFSETS = tuple((dy, dx) for dy in (-1, 0, 1) for dx in (-1, 0, 1))


# ------------------------------ fused kernel --------------------------------

def _fused_cnn_kernel(x_ref, w_ref, b_ref, o_ref, patches_ref, *, h, w,
                      mxu_dtype):
    """Whole CNNEncoder forward on the lane-dense (channels, N*H*W) layout.

    x_ref       : (1, L)        input, lane p = n*H*W + r*W + c
    w_ref       : (4*CPAD, 72)  packed conv weights (8-row block per layer)
    b_ref       : (CPAD, 8)     packed biases (one lane column per layer)
    o_ref       : (1, L)        output (single real channel)
    patches_ref : (72, L)       VMEM scratch: per-conv im2col slab (reused)
    """
    L = x_ref.shape[-1]
    img = h * w

    # ---- lane -> per-image (row, col); bit ops when sizes are powers of 2 ---
    lane = jax.lax.broadcasted_iota(jnp.int32, (1, L), 1)
    if (img & (img - 1)) == 0 and (w & (w - 1)) == 0:
        q = lane & (img - 1)
        row = q >> (w.bit_length() - 1)
        col = q & (w - 1)
    else:
        q = lane % img
        row = q // w
        col = q % w

    def shift_lanes(a, d):
        # a'[..., p] = a[..., p + d]  (circular; see wrap-around invariants).
        if d == 0:
            return a
        return pltpu.roll(a, (-d) % L, 1)

    def fmask(cond):
        # float 0/1 mask (applied as a multiply -> no bool broadcasts needed)
        return jnp.where(cond, 1.0, 0.0)

    # ---- hoisted border masks: only strides 1 and 2 occur ------------------
    # valid(dy, dx, s)  <=>  0 <= row + s*dy < h  and  0 <= col + s*dx < w.
    # Built once per stride, shared by conv1/conv4 (s=1) and conv2/conv3 (s=2);
    # the centre tap (0,0) is always valid and gets no mask at all.
    def build_masks(s):
        rv = {-1: fmask(row >= s), 0: None, 1: fmask(row < h - s)}
        cv = {-1: fmask(col >= s), 0: None, 1: fmask(col < w - s)}
        out = []
        for dy, dx in OFFSETS:
            r, c = rv[dy], cv[dx]
            if r is None:
                out.append(c)          # centre tap: None
            elif c is None:
                out.append(r)
            else:
                out.append(r * c)
        return out

    masks_by_stride = {1: build_masks(1), 2: build_masks(2)}

    def matmul(w_mat, patches):
        return jax.lax.dot_general(
            w_mat.astype(mxu_dtype), patches,
            dimension_numbers=(((1,), (0,)), ((), ())),
            preferred_element_type=jnp.float32)

    def bias(layer):
        return b_ref[:, pl.ds(layer, 1)]                      # (CPAD, 1)

    def conv3x3(act, layer, s, relu):
        """3x3 'same' conv of an 8-sublane activation living on a stride-`s`
        dilated grid.  im2col is assembled tap-by-tap into the VMEM scratch
        (aligned 8-row stores, bounded vreg live ranges), then ONE MXU dot."""
        masks = masks_by_stride[s]
        for t, (dy, dx) in enumerate(OFFSETS):
            shifted = shift_lanes(act, s * (dy * w + dx))
            tap = shifted if masks[t] is None else shifted * masks[t]
            patches_ref[pl.ds(CPAD * t, CPAD), :] = tap.astype(mxu_dtype)
        out = matmul(w_ref[pl.ds(CPAD * layer, CPAD), :], patches_ref[...])
        out = out + bias(layer)
        return jnp.maximum(out, 0.0) if relu else out

    def conv3x3_first(x1):
        """conv1: single input channel -> reduced-K im2col (9 real rows padded
        to 16) and an (8, 16) weight slice: far fewer patch-row stores and a
        much smaller MXU contraction than the generic K=72 path."""
        masks = masks_by_stride[1]
        # Zero the K-padding rows first: w1's padded columns are zero, but
        # 0 * uninitialised-VMEM (possibly NaN) would still poison the MXU
        # accumulation.  Row 8 is overwritten by tap 8 in the loop below.
        patches_ref[pl.ds(CPAD, CPAD), :] = jnp.zeros((CPAD, L), mxu_dtype)
        for t, (dy, dx) in enumerate(OFFSETS):
            shifted = shift_lanes(x1, dy * w + dx)
            tap = shifted if masks[t] is None else shifted * masks[t]
            patches_ref[pl.ds(t, 1), :] = tap.astype(mxu_dtype)
        out = matmul(w_ref[pl.ds(0, CPAD), pl.ds(0, K1DIM)],
                     patches_ref[pl.ds(0, K1DIM), :])
        out = out + bias(0)
        return jnp.maximum(out, 0.0)

    def maxpool2x2(act, s):
        # 2x2 / stride-2 pool of the stride-`s` grid -> stride-`2s` grid
        # (no lane compaction; dead lanes ride along on otherwise idle units).
        hmax = jnp.maximum(act, shift_lanes(act, s))
        return jnp.maximum(hmax, shift_lanes(hmax, s * w))

    def upsample2x(act, s_out):
        # nearest-neighbour x2: stride-(2*s_out) grid -> stride-s_out grid
        cm = fmask((col & (2 * s_out - 1)) >= s_out)
        rm = fmask((row & (2 * s_out - 1)) >= s_out)
        st1 = act * (1.0 - cm) + shift_lanes(act, -s_out) * cm
        return st1 * (1.0 - rm) + shift_lanes(st1, -s_out * w) * rm

    x1 = x_ref[...]                                   # (1, L) single input channel
    # encoder
    a1 = conv3x3_first(x1)                            # H   x W
    p1 = maxpool2x2(a1, s=1)                          # H/2 x W/2  (stride-2 grid)
    a2 = conv3x3(p1, layer=1, s=2, relu=True)         # H/2 x W/2
    p2 = maxpool2x2(a2, s=2)                          # H/4 x W/4  (stride-4 grid)
    # decoder
    u1 = upsample2x(p2, s_out=2)                      # H/2 x W/2  (stride-2 grid)
    a3 = conv3x3(u1, layer=2, s=2, relu=True)         # H/2 x W/2
    u2 = upsample2x(a3, s_out=1)                      # H   x W
    a4 = conv3x3(u2, layer=3, s=1, relu=False)        # H   x W
    o_ref[...] = a4[0:1, :]                           # the single real out channel


# ------------------------------ host packing --------------------------------

def _pack_params(params):
    """Pack all conv weights/biases into two small kernel operands.

    w_all : (4*CPAD, 72)  row block i (8 rows) = layer-i weights.
            Layer 0 (1 input channel): reduced-K layout -- column t (t < 9) is
            the (ky, kx) tap weight, remaining columns zero.
            Layers 1..3: tap-major / channel-minor im2col layout (8 ch / tap).
    b_all : (CPAD, 8)     column i = layer-i bias (zero padded).
    """
    w_all = jnp.zeros((4 * CPAD, KDIM), jnp.float32)
    w1 = jnp.asarray(params["w1"], jnp.float32)                  # (4, 1, 3, 3)
    w_all = w_all.at[: w1.shape[0], :NTAPS].set(
        jnp.transpose(w1, (0, 2, 3, 1)).reshape(w1.shape[0], NTAPS))
    for i, name in enumerate(("w2", "w3", "w4"), start=1):
        wi = jnp.asarray(params[name], jnp.float32)
        cout, cin = wi.shape[0], wi.shape[1]
        full = jnp.zeros((CPAD, KH, KW, CPAD), jnp.float32)
        full = full.at[:cout, :, :, :cin].set(jnp.transpose(wi, (0, 2, 3, 1)))
        w_all = w_all.at[i * CPAD:(i + 1) * CPAD, :].set(full.reshape(CPAD, KDIM))
    b_all = jnp.zeros((CPAD, CPAD), jnp.float32)
    for i, name in enumerate(("b1", "b2", "b3", "b4")):
        bi = jnp.asarray(params[name], jnp.float32)
        b_all = b_all.at[: bi.shape[0], i].set(bi)
    return w_all, b_all


def cnn_encoder_forward(x_nchw, params, *, mxu_dtype=jnp.float32):
    """Matches CNNEncoder.forward.  Input/output are NCHW float32.

    mxu_dtype: keep jnp.float32 (exact; required on v5e which has no bf16 VPU).
    On v6e/v7x, jnp.bfloat16 halves the im2col-slab bytes at the MXU.
    """
    n, cin, h, w = x_nchw.shape
    if cin != 1:
        raise ValueError("CNNEncoder's first conv expects 1 input channel")
    # Two 2x2/stride-2 pools + two x2 upsamples; the dilated-grid trick and
    # the border-mask wrap-around safety both rely on this.
    if h % 4 or w % 4 or h < 4 or w < 4:
        raise ValueError("H and W must be multiples of 4 (and >= 4)")
    L = n * h * w   # lane dim; N*H*W = 512 here -> full-width (unmasked) stores

    w_all, b_all = _pack_params(params)
    x_flat = x_nchw.reshape(1, L)       # batch+spatial -> lanes (row-major, free)

    vmem = functools.partial(pl.BlockSpec, memory_space=pltpu.MemorySpace.VMEM)
    out = pl.pallas_call(
        functools.partial(_fused_cnn_kernel, h=h, w=w, mxu_dtype=mxu_dtype),
        out_shape=jax.ShapeDtypeStruct((1, L), jnp.float32),
        in_specs=[vmem(), vmem(), vmem()],     # 3 operands instead of 9
        out_specs=vmem(),
        scratch_shapes=[pltpu.VMEM((KDIM, L), mxu_dtype)],   # shared im2col slab
    )(x_flat, w_all, b_all)
    # TODO(synk): on v7x with large batches, add a leading "parallel" grid axis
    # over batch chunks (dimension_semantics) so both TensorCores are used, and
    # size the per-step lane chunk for 64 MiB VMEM (not 128 MiB).
    # TODO(synk): if H/W grow beyond ~32x32, compact lanes after pool1 instead
    # of running conv2/conv3/pool2 on the dilated grid.
    return out.reshape(n, 1, h, w)


# -------------------------- pure-XLA reference --------------------------------

def _reference_forward(x, params):
    """Plain-JAX reference of the PyTorch module (no Pallas), for validation."""
    def conv(x, w, b):
        y = jax.lax.conv_general_dilated(
            x, w, window_strides=(1, 1), padding=((1, 1), (1, 1)),
            dimension_numbers=("NCHW", "OIHW", "NCHW"),
            precision=jax.lax.Precision.HIGHEST)
        return y + b[None, :, None, None]

    def pool(x):
        return jax.lax.reduce_window(x, -jnp.inf, jax.lax.max,
                                     (1, 1, 2, 2), (1, 1, 2, 2), "VALID")

    def up(x):
        return jnp.repeat(jnp.repeat(x, 2, axis=2), 2, axis=3)

    relu = jax.nn.relu
    x = pool(relu(conv(x, params["w1"], params["b1"])))
    x = pool(relu(conv(x, params["w2"], params["b2"])))
    x = relu(conv(up(x), params["w3"], params["b3"]))
    x = conv(up(x), params["w4"], params["b4"])
    return x


# ------------------------------ parameter init --------------------------------

def init_params(key):
    """PyTorch-layout params with Conv2d default init (U(+-1/sqrt(fan_in)))."""
    shapes = {
        "w1": (4, 1, 3, 3), "w2": (8, 4, 3, 3),
        "w3": (4, 8, 3, 3), "w4": (1, 4, 3, 3),
    }
    params = {}
    keys = jax.random.split(key, 2 * len(shapes))
    for i, (name, shape) in enumerate(shapes.items()):
        fan_in = shape[1] * shape[2] * shape[3]
        bound = 1.0 / float(fan_in) ** 0.5
        params[name] = jax.random.uniform(
            keys[2 * i], shape, jnp.float32, -bound, bound)
        params["b" + name[1:]] = jax.random.uniform(
            keys[2 * i + 1], (shape[0],), jnp.float32, -bound, bound)
    return params


# ---------------------------------- main --------------------------------------

if __name__ == "__main__":
    key = jax.random.PRNGKey(0)
    k_x, k_p = jax.random.split(key)

    # Conv2d(1, ...) => 1 input channel; batch=2, 16x16 spatial (NCHW).
    x = jax.random.normal(k_x, (2, 1, 16, 16), dtype=jnp.float32)
    params = init_params(k_p)

    fwd = jax.jit(cnn_encoder_forward)
    out = fwd(x, params)
    jax.block_until_ready(out)

    assert out.shape == (2, 1, 16, 16), out.shape
    assert out.dtype == jnp.float32
    assert bool(jnp.isfinite(out).all())

    # Validate against the pure-XLA reference.  Tolerance tightened from 5e-2
    # so indexing/masking regressions cannot hide behind it (f32-MXU path).
    ref = _reference_forward(x, params)
    err = float(jnp.max(jnp.abs(out - ref)))
    assert err < 2e-3, f"max abs error vs reference: {err}"

    print("KERNEL_OK")
</pallas_src>

<mosaic_0001>
module attributes {stable_mosaic.version = 11 : i64} {
  func.func @_fused_cnn_kernel(%arg0: memref<1x512xf32, #tpu.memory_space<vmem>>, %arg1: memref<32x72xf32, #tpu.memory_space<vmem>>, %arg2: memref<8x8xf32, #tpu.memory_space<vmem>>, %arg3: memref<1x512xf32, #tpu.memory_space<vmem>>, %arg4: memref<72x512xf32, #tpu.memory_space<vmem>>) attributes {dimension_semantics = [], scalar_prefetch = 0 : i64, scratch_operands = 1 : i64, tpu.core_type = #tpu.core_type<tc>} {
    %0 = tpu.iota {dimensions = array<i32: 1>} : vector<1x512xi32>
    %c255_i32 = arith.constant 255 : i32
    %1 = vector.broadcast %c255_i32 : i32 to vector<1x512xi32>
    %2 = arith.andi %0, %1 : vector<1x512xi32>
    %c4_i32 = arith.constant 4 : i32
    %3 = vector.broadcast %c4_i32 : i32 to vector<1x512xi32>
    %4 = arith.shrsi %2, %3 : vector<1x512xi32>
    %c15_i32 = arith.constant 15 : i32
    %5 = vector.broadcast %c15_i32 : i32 to vector<1x512xi32>
    %6 = arith.andi %2, %5 : vector<1x512xi32>
    %c1_i32 = arith.constant 1 : i32
    %7 = vector.broadcast %c1_i32 : i32 to vector<1x512xi32>
    %8 = arith.cmpi sge, %4, %7 : vector<1x512xi32>
    %cst = arith.constant 1.000000e+00 : f32
    %cst_0 = arith.constant 0.000000e+00 : f32
    %9 = vector.broadcast %cst : f32 to vector<1x512xf32>
    %10 = vector.broadcast %cst_0 : f32 to vector<1x512xf32>
    %11 = arith.select %8, %9, %10 : vector<1x512xi1>, vector<1x512xf32>
    %c15_i32_1 = arith.constant 15 : i32
    %12 = vector.broadcast %c15_i32_1 : i32 to vector<1x512xi32>
    %13 = arith.cmpi slt, %4, %12 : vector<1x512xi32>
    %cst_2 = arith.constant 1.000000e+00 : f32
    %cst_3 = arith.constant 0.000000e+00 : f32
    %14 = vector.broadcast %cst_2 : f32 to vector<1x512xf32>
    %15 = vector.broadcast %cst_3 : f32 to vector<1x512xf32>
    %16 = arith.select %13, %14, %15 : vector<1x512xi1>, vector<1x512xf32>
    %c1_i32_4 = arith.constant 1 : i32
    %17 = vector.broadcast %c1_i32_4 : i32 to vector<1x512xi32>
    %18 = arith.cmpi sge, %6, %17 : vector<1x512xi32>
    %cst_5 = arith.constant 1.000000e+00 : f32
    %cst_6 = arith.constant 0.000000e+00 : f32
    %19 = vector.broadcast %cst_5 : f32 to vector<1x512xf32>
    %20 = vector.broadcast %cst_6 : f32 to vector<1x512xf32>
    %21 = arith.select %18, %19, %20 : vector<1x512xi1>, vector<1x512xf32>
    %c15_i32_7 = arith.constant 15 : i32
    %22 = vector.broadcast %c15_i32_7 : i32 to vector<1x512xi32>
    %23 = arith.cmpi slt, %6, %22 : vector<1x512xi32>
    %cst_8 = arith.constant 1.000000e+00 : f32
    %cst_9 = arith.constant 0.000000e+00 : f32
    %24 = vector.broadcast %cst_8 : f32 to vector<1x512xf32>
    %25 = vector.broadcast %cst_9 : f32 to vector<1x512xf32>
    %26 = arith.select %23, %24, %25 : vector<1x512xi1>, vector<1x512xf32>
    %27 = arith.mulf %11, %21 : vector<1x512xf32>
    %28 = arith.mulf %11, %26 : vector<1x512xf32>
    %29 = arith.mulf %16, %21 : vector<1x512xf32>
    %30 = arith.mulf %16, %26 : vector<1x512xf32>
    %c2_i32 = arith.constant 2 : i32
    %31 = vector.broadcast %c2_i32 : i32 to vector<1x512xi32>
    %32 = arith.cmpi sge, %4, %31 : vector<1x512xi32>
    %cst_10 = arith.constant 1.000000e+00 : f32
    %cst_11 = arith.constant 0.000000e+00 : f32
    %33 = vector.broadcast %cst_10 : f32 to vector<1x512xf32>
    %34 = vector.broadcast %cst_11 : f32 to vector<1x512xf32>
    %35 = arith.select %32, %33, %34 : vector<1x512xi1>, vector<1x512xf32>
    %c14_i32 = arith.constant 14 : i32
    %36 = vector.broadcast %c14_i32 : i32 to vector<1x512xi32>
    %37 = arith.cmpi slt, %4, %36 : vector<1x512xi32>
    %cst_12 = arith.constant 1.000000e+00 : f32
    %cst_13 = arith.constant 0.000000e+00 : f32
    %38 = vector.broadcast %cst_12 : f32 to vector<1x512xf32>
    %39 = vector.broadcast %cst_13 : f32 to vector<1x512xf32>
    %40 = arith.select %37, %38, %39 : vector<1x512xi1>, vector<1x512xf32>
    %c2_i32_14 = arith.constant 2 : i32
    %41 = vector.broadcast %c2_i32_14 : i32 to vector<1x512xi32>
    %42 = arith.cmpi sge, %6, %41 : vector<1x512xi32>
    %cst_15 = arith.constant 1.000000e+00 : f32
    %cst_16 = arith.constant 0.000000e+00 : f32
    %43 = vector.broadcast %cst_15 : f32 to vector<1x512xf32>
    %44 = vector.broadcast %cst_16 : f32 to vector<1x512xf32>
    %45 = arith.select %42, %43, %44 : vector<1x512xi1>, vector<1x512xf32>
    %c14_i32_17 = arith.constant 14 : i32
    %46 = vector.broadcast %c14_i32_17 : i32 to vector<1x512xi32>
    %47 = arith.cmpi slt, %6, %46 : vector<1x512xi32>
    %cst_18 = arith.constant 1.000000e+00 : f32
    %cst_19 = arith.constant 0.000000e+00 : f32
    %48 = vector.broadcast %cst_18 : f32 to vector<1x512xf32>
    %49 = vector.broadcast %cst_19 : f32 to vector<1x512xf32>
    %50 = arith.select %47, %48, %49 : vector<1x512xi1>, vector<1x512xf32>
    %51 = arith.mulf %35, %45 : vector<1x512xf32>
    %52 = arith.mulf %35, %50 : vector<1x512xf32>
    %53 = arith.mulf %40, %45 : vector<1x512xf32>
    %54 = arith.mulf %40, %50 : vector<1x512xf32>
    %c0 = arith.constant 0 : index
    %c0_20 = arith.constant 0 : index
    %55 = vector.load %arg0[%c0, %c0_20] : memref<1x512xf32, #tpu.memory_space<vmem>>, vector<1x512xf32>
    %cst_21 = arith.constant 0.000000e+00 : f32
    %56 = vector.broadcast %cst_21 : f32 to vector<8x512xf32>
    %c8 = arith.constant 8 : index
    %c0_22 = arith.constant 0 : index
    %57 = vector.load %arg4[%c8, %c0_22] : memref<72x512xf32, #tpu.memory_space<vmem>>, vector<8x512xf32>
    tpu.vector_store %arg4[%c8, %c0_22], %56 {strides = array<i32>} : memref<72x512xf32, #tpu.memory_space<vmem>>, vector<8x512xf32>,
    %c17_i32 = arith.constant 17 : i32
    %58 = tpu.dynamic_rotate %55 by %c17_i32 dim 1 : vector<1x512xf32>, i32 -> vector<1x512xf32>
    %59 = arith.mulf %58, %27 : vector<1x512xf32>
    %c0_23 = arith.constant 0 : index
    %c0_24 = arith.constant 0 : index
    %60 = vector.load %arg4[%c0_23, %c0_24] : memref<72x512xf32, #tpu.memory_space<vmem>>, vector<1x512xf32>
    tpu.vector_store %arg4[%c0_23, %c0_24], %59 {strides = array<i32>} : memref<72x512xf32, #tpu.memory_space<vmem>>, vector<1x512xf32>,
    %c16_i32 = arith.constant 16 : i32
    %61 = tpu.dynamic_rotate %55 by %c16_i32 dim 1 : vector<1x512xf32>, i32 -> vector<1x512xf32>
    %62 = arith.mulf %61, %11 : vector<1x512xf32>
    %c1 = arith.constant 1 : index
    %c0_25 = arith.constant 0 : index
    %63 = vector.load %arg4[%c1, %c0_25] : memref<72x512xf32, #tpu.memory_space<vmem>>, vector<1x512xf32>
    tpu.vector_store %arg4[%c1, %c0_25], %62 {strides = array<i32>} : memref<72x512xf32, #tpu.memory_space<vmem>>, vector<1x512xf32>,
    %c15_i32_26 = arith.constant 15 : i32
    %64 = tpu.dynamic_rotate %55 by %c15_i32_26 dim 1 : vector<1x512xf32>, i32 -> vector<1x512xf32>
    %65 = arith.mulf %64, %28 : vector<1x512xf32>
    %c2 = arith.constant 2 : index
    %c0_27 = arith.constant 0 : index
    %66 = vector.load %arg4[%c2, %c0_27] : memref<72x512xf32, #tpu.memory_space<vmem>>, vector<1x512xf32>
    tpu.vector_store %arg4[%c2, %c0_27], %65 {strides = array<i32>} : memref<72x512xf32, #tpu.memory_space<vmem>>, vector<1x512xf32>,
    %c1_i32_28 = arith.constant 1 : i32
    %67 = tpu.dynamic_rotate %55 by %c1_i32_28 dim 1 : vector<1x512xf32>, i32 -> vector<1x512xf32>
    %68 = arith.mulf %67, %21 : vector<1x512xf32>
    %c3 = arith.constant 3 : index
    %c0_29 = arith.constant 0 : index
    %69 = vector.load %arg4[%c3, %c0_29] : memref<72x512xf32, #tpu.memory_space<vmem>>, vector<1x512xf32>
    tpu.vector_store %arg4[%c3, %c0_29], %68 {strides = array<i32>} : memref<72x512xf32, #tpu.memory_space<vmem>>, vector<1x512xf32>,
    %c4 = arith.constant 4 : index
    %c0_30 = arith.constant 0 : index
    %70 = vector.load %arg4[%c4, %c0_30] : memref<72x512xf32, #tpu.memory_space<vmem>>, vector<1x512xf32>
    tpu.vector_store %arg4[%c4, %c0_30], %55 {strides = array<i32>} : memref<72x512xf32, #tpu.memory_space<vmem>>, vector<1x512xf32>,
    %c511_i32 = arith.constant 511 : i32
    %71 = tpu.dynamic_rotate %55 by %c511_i32 dim 1 : vector<1x512xf32>, i32 -> vector<1x512xf32>
    %72 = arith.mulf %71, %26 : vector<1x512xf32>
    %c5 = arith.constant 5 : index
    %c0_31 = arith.constant 0 : index
    %73 = vector.load %arg4[%c5, %c0_31] : memref<72x512xf32, #tpu.memory_space<vmem>>, vector<1x512xf32>
    tpu.vector_store %arg4[%c5, %c0_31], %72 {strides = array<i32>} : memref<72x512xf32, #tpu.memory_space<vmem>>, vector<1x512xf32>,
    %c497_i32 = arith.constant 497 : i32
    %74 = tpu.dynamic_rotate %55 by %c497_i32 dim 1 : vector<1x512xf32>, i32 -> vector<1x512xf32>
    %75 = arith.mulf %74, %29 : vector<1x512xf32>
    %c6 = arith.constant 6 : index
    %c0_32 = arith.constant 0 : index
    %76 = vector.load %arg4[%c6, %c0_32] : memref<72x512xf32, #tpu.memory_space<vmem>>, vector<1x512xf32>
    tpu.vector_store %arg4[%c6, %c0_32], %75 {strides = array<i32>} : memref<72x512xf32, #tpu.memory_space<vmem>>, vector<1x512xf32>,
    %c496_i32 = arith.constant 496 : i32
    %77 = tpu.dynamic_rotate %55 by %c496_i32 dim 1 : vector<1x512xf32>, i32 -> vector<1x512xf32>
    %78 = arith.mulf %77, %16 : vector<1x512xf32>
    %c7 = arith.constant 7 : index
    %c0_33 = arith.constant 0 : index
    %79 = vector.load %arg4[%c7, %c0_33] : memref<72x512xf32, #tpu.memory_space<vmem>>, vector<1x512xf32>
    tpu.vector_store %arg4[%c7, %c0_33], %78 {strides = array<i32>} : memref<72x512xf32, #tpu.memory_space<vmem>>, vector<1x512xf32>,
    %c495_i32 = arith.constant 495 : i32
    %80 = tpu.dynamic_rotate %55 by %c495_i32 dim 1 : vector<1x512xf32>, i32 -> vector<1x512xf32>
    %81 = arith.mulf %80, %30 : vector<1x512xf32>
    %c8_34 = arith.constant 8 : index
    %c0_35 = arith.constant 0 : index
    %82 = vector.load %arg4[%c8_34, %c0_35] : memref<72x512xf32, #tpu.memory_space<vmem>>, vector<1x512xf32>
    tpu.vector_store %arg4[%c8_34, %c0_35], %81 {strides = array<i32>} : memref<72x512xf32, #tpu.memory_space<vmem>>, vector<1x512xf32>,
    %c0_36 = arith.constant 0 : index
    %c0_37 = arith.constant 0 : index
    %83 = vector.load %arg1[%c0_36, %c0_37] : memref<32x72xf32, #tpu.memory_space<vmem>>, vector<8x16xf32>
    %c0_38 = arith.constant 0 : index
    %c0_39 = arith.constant 0 : index
    %84 = vector.load %arg4[%c0_38, %c0_39] : memref<72x512xf32, #tpu.memory_space<vmem>>, vector<16x512xf32>
    %cst_40 = arith.constant dense<0.000000e+00> : vector<8x512xf32>
    %85 = tpu.matmul %83, %84, %cst_40 {dimension_numbers = #tpu.dot_dimension_numbers<[1], [0], [0], [1], [0, 0, 1, 1], [], []>} : vector<8x16xf32>, vector<16x512xf32>, vector<8x512xf32> -> vector<8x512xf32>
    %c0_41 = arith.constant 0 : index
    %c0_42 = arith.constant 0 : index
    %86 = vector.load %arg2[%c0_41, %c0_42] : memref<8x8xf32, #tpu.memory_space<vmem>>, vector<8x1xf32>
    %87 = vector.broadcast %86 : vector<8x1xf32> to vector<8x512xf32>
    %88 = arith.addf %85, %87 : vector<8x512xf32>
    %cst_43 = arith.constant 0.000000e+00 : f32
    %89 = vector.broadcast %cst_43 : f32 to vector<8x512xf32>
    %90 = arith.maximumf %88, %89 : vector<8x512xf32>
    %c511_i32_44 = arith.constant 511 : i32
    %91 = tpu.dynamic_rotate %90 by %c511_i32_44 dim 1 : vector<8x512xf32>, i32 -> vector<8x512xf32>
    %92 = arith.maximumf %90, %91 : vector<8x512xf32>
    %c496_i32_45 = arith.constant 496 : i32
    %93 = tpu.dynamic_rotate %92 by %c496_i32_45 dim 1 : vector<8x512xf32>, i32 -> vector<8x512xf32>
    %94 = arith.maximumf %92, %93 : vector<8x512xf32>
    %c34_i32 = arith.constant 34 : i32
    %95 = tpu.dynamic_rotate %94 by %c34_i32 dim 1 : vector<8x512xf32>, i32 -> vector<8x512xf32>
    %96 = vector.broadcast %51 : vector<1x512xf32> to vector<8x512xf32>
    %97 = arith.mulf %95, %96 : vector<8x512xf32>
    %c0_46 = arith.constant 0 : index
    %c0_47 = arith.constant 0 : index
    %98 = vector.load %arg4[%c0_46, %c0_47] : memref<72x512xf32, #tpu.memory_space<vmem>>, vector<8x512xf32>
    tpu.vector_store %arg4[%c0_46, %c0_47], %97 {strides = array<i32>} : memref<72x512xf32, #tpu.memory_space<vmem>>, vector<8x512xf32>,
    %c32_i32 = arith.constant 32 : i32
    %99 = tpu.dynamic_rotate %94 by %c32_i32 dim 1 : vector<8x512xf32>, i32 -> vector<8x512xf32>
    %100 = vector.broadcast %35 : vector<1x512xf32> to vector<8x512xf32>
    %101 = arith.mulf %99, %100 : vector<8x512xf32>
    %c8_48 = arith.constant 8 : index
    %c0_49 = arith.constant 0 : index
    %102 = vector.load %arg4[%c8_48, %c0_49] : memref<72x512xf32, #tpu.memory_space<vmem>>, vector<8x512xf32>
    tpu.vector_store %arg4[%c8_48, %c0_49], %101 {strides = array<i32>} : memref<72x512xf32, #tpu.memory_space<vmem>>, vector<8x512xf32>,
    %c30_i32 = arith.constant 30 : i32
    %103 = tpu.dynamic_rotate %94 by %c30_i32 dim 1 : vector<8x512xf32>, i32 -> vector<8x512xf32>
    %104 = vector.broadcast %52 : vector<1x512xf32> to vector<8x512xf32>
    %105 = arith.mulf %103, %104 : vector<8x512xf32>
    %c16 = arith.constant 16 : index
    %c0_50 = arith.constant 0 : index
    %106 = vector.load %arg4[%c16, %c0_50] : memref<72x512xf32, #tpu.memory_space<vmem>>, vector<8x512xf32>
    tpu.vector_store %arg4[%c16, %c0_50], %105 {strides = array<i32>} : memref<72x512xf32, #tpu.memory_space<vmem>>, vector<8x512xf32>,
    %c2_i32_51 = arith.constant 2 : i32
    %107 = tpu.dynamic_rotate %94 by %c2_i32_51 dim 1 : vector<8x512xf32>, i32 -> vector<8x512xf32>
    %108 = vector.broadcast %45 : vector<1x512xf32> to vector<8x512xf32>
    %109 = arith.mulf %107, %108 : vector<8x512xf32>
    %c24 = arith.constant 24 : index
    %c0_52 = arith.constant 0 : index
    %110 = vector.load %arg4[%c24, %c0_52] : memref<72x512xf32, #tpu.memory_space<vmem>>, vector<8x512xf32>
    tpu.vector_store %arg4[%c24, %c0_52], %109 {strides = array<i32>} : memref<72x512xf32, #tpu.memory_space<vmem>>, vector<8x512xf32>,
    %c32 = arith.constant 32 : index
    %c0_53 = arith.constant 0 : index
    %111 = vector.load %arg4[%c32, %c0_53] : memref<72x512xf32, #tpu.memory_space<vmem>>, vector<8x512xf32>
    tpu.vector_store %arg4[%c32, %c0_53], %94 {strides = array<i32>} : memref<72x512xf32, #tpu.memory_space<vmem>>, vector<8x512xf32>,
    %c510_i32 = arith.constant 510 : i32
    %112 = tpu.dynamic_rotate %94 by %c510_i32 dim 1 : vector<8x512xf32>, i32 -> vector<8x512xf32>
    %113 = vector.broadcast %50 : vector<1x512xf32> to vector<8x512xf32>
    %114 = arith.mulf %112, %113 : vector<8x512xf32>
    %c40 = arith.constant 40 : index
    %c0_54 = arith.constant 0 : index
    %115 = vector.load %arg4[%c40, %c0_54] : memref<72x512xf32, #tpu.memory_space<vmem>>, vector<8x512xf32>
    tpu.vector_store %arg4[%c40, %c0_54], %114 {strides = array<i32>} : memref<72x512xf32, #tpu.memory_space<vmem>>, vector<8x512xf32>,
    %c482_i32 = arith.constant 482 : i32
    %116 = tpu.dynamic_rotate %94 by %c482_i32 dim 1 : vector<8x512xf32>, i32 -> vector<8x512xf32>
    %117 = vector.broadcast %53 : vector<1x512xf32> to vector<8x512xf32>
    %118 = arith.mulf %116, %117 : vector<8x512xf32>
    %c48 = arith.constant 48 : index
    %c0_55 = arith.constant 0 : index
    %119 = vector.load %arg4[%c48, %c0_55] : memref<72x512xf32, #tpu.memory_space<vmem>>, vector<8x512xf32>
    tpu.vector_store %arg4[%c48, %c0_55], %118 {strides = array<i32>} : memref<72x512xf32, #tpu.memory_space<vmem>>, vector<8x512xf32>,
    %c480_i32 = arith.constant 480 : i32
    %120 = tpu.dynamic_rotate %94 by %c480_i32 dim 1 : vector<8x512xf32>, i32 -> vector<8x512xf32>
    %121 = vector.broadcast %40 : vector<1x512xf32> to vector<8x512xf32>
    %122 = arith.mulf %120, %121 : vector<8x512xf32>
    %c56 = arith.constant 56 : index
    %c0_56 = arith.constant 0 : index
    %123 = vector.load %arg4[%c56, %c0_56] : memref<72x512xf32, #tpu.memory_space<vmem>>, vector<8x512xf32>
    tpu.vector_store %arg4[%c56, %c0_56], %122 {strides = array<i32>} : memref<72x512xf32, #tpu.memory_space<vmem>>, vector<8x512xf32>,
    %c478_i32 = arith.constant 478 : i32
    %124 = tpu.dynamic_rotate %94 by %c478_i32 dim 1 : vector<8x512xf32>, i32 -> vector<8x512xf32>
    %125 = vector.broadcast %54 : vector<1x512xf32> to vector<8x512xf32>
    %126 = arith.mulf %124, %125 : vector<8x512xf32>
    %c64 = arith.constant 64 : index
    %c0_57 = arith.constant 0 : index
    %127 = vector.load %arg4[%c64, %c0_57] : memref<72x512xf32, #tpu.memory_space<vmem>>, vector<8x512xf32>
    tpu.vector_store %arg4[%c64, %c0_57], %126 {strides = array<i32>} : memref<72x512xf32, #tpu.memory_space<vmem>>, vector<8x512xf32>,
    %c8_58 = arith.constant 8 : index
    %c0_59 = arith.constant 0 : index
    %128 = vector.load %arg1[%c8_58, %c0_59] : memref<32x72xf32, #tpu.memory_space<vmem>>, vector<8x72xf32>
    %c0_60 = arith.constant 0 : index
    %c0_61 = arith.constant 0 : index
    %129 = vector.load %arg4[%c0_60, %c0_61] : memref<72x512xf32, #tpu.memory_space<vmem>>, vector<72x512xf32>
    %cst_62 = arith.constant dense<0.000000e+00> : vector<8x512xf32>
    %130 = tpu.matmul %128, %129, %cst_62 {dimension_numbers = #tpu.dot_dimension_numbers<[1], [0], [0], [1], [0, 0, 1, 1], [], []>} : vector<8x72xf32>, vector<72x512xf32>, vector<8x512xf32> -> vector<8x512xf32>
    %c0_63 = arith.constant 0 : index
    %c1_64 = arith.constant 1 : index
    %131 = vector.load %arg2[%c0_63, %c1_64] : memref<8x8xf32, #tpu.memory_space<vmem>>, vector<8x1xf32>
    %132 = vector.broadcast %131 : vector<8x1xf32> to vector<8x512xf32>
    %133 = arith.addf %130, %132 : vector<8x512xf32>
    %cst_65 = arith.constant 0.000000e+00 : f32
    %134 = vector.broadcast %cst_65 : f32 to vector<8x512xf32>
    %135 = arith.maximumf %133, %134 : vector<8x512xf32>
    %c510_i32_66 = arith.constant 510 : i32
    %136 = tpu.dynamic_rotate %135 by %c510_i32_66 dim 1 : vector<8x512xf32>, i32 -> vector<8x512xf32>
    %137 = arith.maximumf %135, %136 : vector<8x512xf32>
    %c480_i32_67 = arith.constant 480 : i32
    %138 = tpu.dynamic_rotate %137 by %c480_i32_67 dim 1 : vector<8x512xf32>, i32 -> vector<8x512xf32>
    %139 = arith.maximumf %137, %138 : vector<8x512xf32>
    %c3_i32 = arith.constant 3 : i32
    %140 = vector.broadcast %c3_i32 : i32 to vector<1x512xi32>
    %141 = arith.andi %6, %140 : vector<1x512xi32>
    %c2_i32_68 = arith.constant 2 : i32
    %142 = vector.broadcast %c2_i32_68 : i32 to vector<1x512xi32>
    %143 = arith.cmpi sge, %141, %142 : vector<1x512xi32>
    %cst_69 = arith.constant 1.000000e+00 : f32
    %cst_70 = arith.constant 0.000000e+00 : f32
    %144 = vector.broadcast %cst_69 : f32 to vector<1x512xf32>
    %145 = vector.broadcast %cst_70 : f32 to vector<1x512xf32>
    %146 = arith.select %143, %144, %145 : vector<1x512xi1>, vector<1x512xf32>
    %c3_i32_71 = arith.constant 3 : i32
    %147 = vector.broadcast %c3_i32_71 : i32 to vector<1x512xi32>
    %148 = arith.andi %4, %147 : vector<1x512xi32>
    %c2_i32_72 = arith.constant 2 : i32
    %149 = vector.broadcast %c2_i32_72 : i32 to vector<1x512xi32>
    %150 = arith.cmpi sge, %148, %149 : vector<1x512xi32>
    %cst_73 = arith.constant 1.000000e+00 : f32
    %cst_74 = arith.constant 0.000000e+00 : f32
    %151 = vector.broadcast %cst_73 : f32 to vector<1x512xf32>
    %152 = vector.broadcast %cst_74 : f32 to vector<1x512xf32>
    %153 = arith.select %150, %151, %152 : vector<1x512xi1>, vector<1x512xf32>
    %cst_75 = arith.constant 1.000000e+00 : f32
    %154 = vector.broadcast %cst_75 : f32 to vector<1x512xf32>
    %155 = arith.subf %154, %146 : vector<1x512xf32>
    %156 = vector.broadcast %155 : vector<1x512xf32> to vector<8x512xf32>
    %157 = arith.mulf %139, %156 : vector<8x512xf32>
    %c2_i32_76 = arith.constant 2 : i32
    %158 = tpu.dynamic_rotate %139 by %c2_i32_76 dim 1 : vector<8x512xf32>, i32 -> vector<8x512xf32>
    %159 = vector.broadcast %146 : vector<1x512xf32> to vector<8x512xf32>
    %160 = arith.mulf %158, %159 : vector<8x512xf32>
    %161 = arith.addf %157, %160 : vector<8x512xf32>
    %cst_77 = arith.constant 1.000000e+00 : f32
    %162 = vector.broadcast %cst_77 : f32 to vector<1x512xf32>
    %163 = arith.subf %162, %153 : vector<1x512xf32>
    %164 = vector.broadcast %163 : vector<1x512xf32> to vector<8x512xf32>
    %165 = arith.mulf %161, %164 : vector<8x512xf32>
    %c32_i32_78 = arith.constant 32 : i32
    %166 = tpu.dynamic_rotate %161 by %c32_i32_78 dim 1 : vector<8x512xf32>, i32 -> vector<8x512xf32>
    %167 = vector.broadcast %153 : vector<1x512xf32> to vector<8x512xf32>
    %168 = arith.mulf %166, %167 : vector<8x512xf32>
    %169 = arith.addf %165, %168 : vector<8x512xf32>
    %c34_i32_79 = arith.constant 34 : i32
    %170 = tpu.dynamic_rotate %169 by %c34_i32_79 dim 1 : vector<8x512xf32>, i32 -> vector<8x512xf32>
    %171 = vector.broadcast %51 : vector<1x512xf32> to vector<8x512xf32>
    %172 = arith.mulf %170, %171 : vector<8x512xf32>
    %c0_80 = arith.constant 0 : index
    %c0_81 = arith.constant 0 : index
    %173 = vector.load %arg4[%c0_80, %c0_81] : memref<72x512xf32, #tpu.memory_space<vmem>>, vector<8x512xf32>
    tpu.vector_store %arg4[%c0_80, %c0_81], %172 {strides = array<i32>} : memref<72x512xf32, #tpu.memory_space<vmem>>, vector<8x512xf32>,
    %c32_i32_82 = arith.constant 32 : i32
    %174 = tpu.dynamic_rotate %169 by %c32_i32_82 dim 1 : vector<8x512xf32>, i32 -> vector<8x512xf32>
    %175 = vector.broadcast %35 : vector<1x512xf32> to vector<8x512xf32>
    %176 = arith.mulf %174, %175 : vector<8x512xf32>
    %c8_83 = arith.constant 8 : index
    %c0_84 = arith.constant 0 : index
    %177 = vector.load %arg4[%c8_83, %c0_84] : memref<72x512xf32, #tpu.memory_space<vmem>>, vector<8x512xf32>
    tpu.vector_store %arg4[%c8_83, %c0_84], %176 {strides = array<i32>} : memref<72x512xf32, #tpu.memory_space<vmem>>, vector<8x512xf32>,
    %c30_i32_85 = arith.constant 30 : i32
    %178 = tpu.dynamic_rotate %169 by %c30_i32_85 dim 1 : vector<8x512xf32>, i32 -> vector<8x512xf32>
    %179 = vector.broadcast %52 : vector<1x512xf32> to vector<8x512xf32>
    %180 = arith.mulf %178, %179 : vector<8x512xf32>
    %c16_86 = arith.constant 16 : index
    %c0_87 = arith.constant 0 : index
    %181 = vector.load %arg4[%c16_86, %c0_87] : memref<72x512xf32, #tpu.memory_space<vmem>>, vector<8x512xf32>
    tpu.vector_store %arg4[%c16_86, %c0_87], %180 {strides = array<i32>} : memref<72x512xf32, #tpu.memory_space<vmem>>, vector<8x512xf32>,
    %c2_i32_88 = arith.constant 2 : i32
    %182 = tpu.dynamic_rotate %169 by %c2_i32_88 dim 1 : vector<8x512xf32>, i32 -> vector<8x512xf32>
    %183 = vector.broadcast %45 : vector<1x512xf32> to vector<8x512xf32>
    %184 = arith.mulf %182, %183 : vector<8x512xf32>
    %c24_89 = arith.constant 24 : index
    %c0_90 = arith.constant 0 : index
    %185 = vector.load %arg4[%c24_89, %c0_90] : memref<72x512xf32, #tpu.memory_space<vmem>>, vector<8x512xf32>
    tpu.vector_store %arg4[%c24_89, %c0_90], %184 {strides = array<i32>} : memref<72x512xf32, #tpu.memory_space<vmem>>, vector<8x512xf32>,
    %c32_91 = arith.constant 32 : index
    %c0_92 = arith.constant 0 : index
    %186 = vector.load %arg4[%c32_91, %c0_92] : memref<72x512xf32, #tpu.memory_space<vmem>>, vector<8x512xf32>
    tpu.vector_store %arg4[%c32_91, %c0_92], %169 {strides = array<i32>} : memref<72x512xf32, #tpu.memory_space<vmem>>, vector<8x512xf32>,
    %c510_i32_93 = arith.constant 510 : i32
    %187 = tpu.dynamic_rotate %169 by %c510_i32_93 dim 1 : vector<8x512xf32>, i32 -> vector<8x512xf32>
    %188 = vector.broadcast %50 : vector<1x512xf32> to vector<8x512xf32>
    %189 = arith.mulf %187, %188 : vector<8x512xf32>
    %c40_94 = arith.constant 40 : index
    %c0_95 = arith.constant 0 : index
    %190 = vector.load %arg4[%c40_94, %c0_95] : memref<72x512xf32, #tpu.memory_space<vmem>>, vector<8x512xf32>
    tpu.vector_store %arg4[%c40_94, %c0_95], %189 {strides = array<i32>} : memref<72x512xf32, #tpu.memory_space<vmem>>, vector<8x512xf32>,
    %c482_i32_96 = arith.constant 482 : i32
    %191 = tpu.dynamic_rotate %169 by %c482_i32_96 dim 1 : vector<8x512xf32>, i32 -> vector<8x512xf32>
    %192 = vector.broadcast %53 : vector<1x512xf32> to vector<8x512xf32>
    %193 = arith.mulf %191, %192 : vector<8x512xf32>
    %c48_97 = arith.constant 48 : index
    %c0_98 = arith.constant 0 : index
    %194 = vector.load %arg4[%c48_97, %c0_98] : memref<72x512xf32, #tpu.memory_space<vmem>>, vector<8x512xf32>
    tpu.vector_store %arg4[%c48_97, %c0_98], %193 {strides = array<i32>} : memref<72x512xf32, #tpu.memory_space<vmem>>, vector<8x512xf32>,
    %c480_i32_99 = arith.constant 480 : i32
    %195 = tpu.dynamic_rotate %169 by %c480_i32_99 dim 1 : vector<8x512xf32>, i32 -> vector<8x512xf32>
    %196 = vector.broadcast %40 : vector<1x512xf32> to vector<8x512xf32>
    %197 = arith.mulf %195, %196 : vector<8x512xf32>
    %c56_100 = arith.constant 56 : index
    %c0_101 = arith.constant 0 : index
    %198 = vector.load %arg4[%c56_100, %c0_101] : memref<72x512xf32, #tpu.memory_space<vmem>>, vector<8x512xf32>
    tpu.vector_store %arg4[%c56_100, %c0_101], %197 {strides = array<i32>} : memref<72x512xf32, #tpu.memory_space<vmem>>, vector<8x512xf32>,
    %c478_i32_102 = arith.constant 478 : i32
    %199 = tpu.dynamic_rotate %169 by %c478_i32_102 dim 1 : vector<8x512xf32>, i32 -> vector<8x512xf32>
    %200 = vector.broadcast %54 : vector<1x512xf32> to vector<8x512xf32>
    %201 = arith.mulf %199, %200 : vector<8x512xf32>
    %c64_103 = arith.constant 64 : index
    %c0_104 = arith.constant 0 : index
    %202 = vector.load %arg4[%c64_103, %c0_104] : memref<72x512xf32, #tpu.memory_space<vmem>>, vector<8x512xf32>
    tpu.vector_store %arg4[%c64_103, %c0_104], %201 {strides = array<i32>} : memref<72x512xf32, #tpu.memory_space<vmem>>, vector<8x512xf32>,
    %c16_105 = arith.constant 16 : index
    %c0_106 = arith.constant 0 : index
    %203 = vector.load %arg1[%c16_105, %c0_106] : memref<32x72xf32, #tpu.memory_space<vmem>>, vector<8x72xf32>
    %c0_107 = arith.constant 0 : index
    %c0_108 = arith.constant 0 : index
    %204 = vector.load %arg4[%c0_107, %c0_108] : memref<72x512xf32, #tpu.memory_space<vmem>>, vector<72x512xf32>
    %cst_109 = arith.constant dense<0.000000e+00> : vector<8x512xf32>
    %205 = tpu.matmul %203, %204, %cst_109 {dimension_numbers = #tpu.dot_dimension_numbers<[1], [0], [0], [1], [0, 0, 1, 1], [], []>} : vector<8x72xf32>, vector<72x512xf32>, vector<8x512xf32> -> vector<8x512xf32>
    %c0_110 = arith.constant 0 : index
    %c2_111 = arith.constant 2 : index
    %206 = vector.load %arg2[%c0_110, %c2_111] : memref<8x8xf32, #tpu.memory_space<vmem>>, vector<8x1xf32>
    %207 = vector.broadcast %206 : vector<8x1xf32> to vector<8x512xf32>
    %208 = arith.addf %205, %207 : vector<8x512xf32>
    %cst_112 = arith.constant 0.000000e+00 : f32
    %209 = vector.broadcast %cst_112 : f32 to vector<8x512xf32>
    %210 = arith.maximumf %208, %209 : vector<8x512xf32>
    %c1_i32_113 = arith.constant 1 : i32
    %211 = vector.broadcast %c1_i32_113 : i32 to vector<1x512xi32>
    %212 = arith.andi %6, %211 : vector<1x512xi32>
    %c1_i32_114 = arith.constant 1 : i32
    %213 = vector.broadcast %c1_i32_114 : i32 to vector<1x512xi32>
    %214 = arith.cmpi sge, %212, %213 : vector<1x512xi32>
    %cst_115 = arith.constant 1.000000e+00 : f32
    %cst_116 = arith.constant 0.000000e+00 : f32
    %215 = vector.broadcast %cst_115 : f32 to vector<1x512xf32>
    %216 = vector.broadcast %cst_116 : f32 to vector<1x512xf32>
    %217 = arith.select %214, %215, %216 : vector<1x512xi1>, vector<1x512xf32>
    %c1_i32_117 = arith.constant 1 : i32
    %218 = vector.broadcast %c1_i32_117 : i32 to vector<1x512xi32>
    %219 = arith.andi %4, %218 : vector<1x512xi32>
    %c1_i32_118 = arith.constant 1 : i32
    %220 = vector.broadcast %c1_i32_118 : i32 to vector<1x512xi32>
    %221 = arith.cmpi sge, %219, %220 : vector<1x512xi32>
    %cst_119 = arith.constant 1.000000e+00 : f32
    %cst_120 = arith.constant 0.000000e+00 : f32
    %222 = vector.broadcast %cst_119 : f32 to vector<1x512xf32>
    %223 = vector.broadcast %cst_120 : f32 to vector<1x512xf32>
    %224 = arith.select %221, %222, %223 : vector<1x512xi1>, vector<1x512xf32>
    %cst_121 = arith.constant 1.000000e+00 : f32
    %225 = vector.broadcast %cst_121 : f32 to vector<1x512xf32>
    %226 = arith.subf %225, %217 : vector<1x512xf32>
    %227 = vector.broadcast %226 : vector<1x512xf32> to vector<8x512xf32>
    %228 = arith.mulf %210, %227 : vector<8x512xf32>
    %c1_i32_122 = arith.constant 1 : i32
    %229 = tpu.dynamic_rotate %210 by %c1_i32_122 dim 1 : vector<8x512xf32>, i32 -> vector<8x512xf32>
    %230 = vector.broadcast %217 : vector<1x512xf32> to vector<8x512xf32>
    %231 = arith.mulf %229, %230 : vector<8x512xf32>
    %232 = arith.addf %228, %231 : vector<8x512xf32>
    %cst_123 = arith.constant 1.000000e+00 : f32
    %233 = vector.broadcast %cst_123 : f32 to vector<1x512xf32>
    %234 = arith.subf %233, %224 : vector<1x512xf32>
    %235 = vector.broadcast %234 : vector<1x512xf32> to vector<8x512xf32>
    %236 = arith.mulf %232, %235 : vector<8x512xf32>
    %c16_i32_124 = arith.constant 16 : i32
    %237 = tpu.dynamic_rotate %232 by %c16_i32_124 dim 1 : vector<8x512xf32>, i32 -> vector<8x512xf32>
    %238 = vector.broadcast %224 : vector<1x512xf32> to vector<8x512xf32>
    %239 = arith.mulf %237, %238 : vector<8x512xf32>
    %240 = arith.addf %236, %239 : vector<8x512xf32>
    %c17_i32_125 = arith.constant 17 : i32
    %241 = tpu.dynamic_rotate %240 by %c17_i32_125 dim 1 : vector<8x512xf32>, i32 -> vector<8x512xf32>
    %242 = vector.broadcast %27 : vector<1x512xf32> to vector<8x512xf32>
    %243 = arith.mulf %241, %242 : vector<8x512xf32>
    %c0_126 = arith.constant 0 : index
    %c0_127 = arith.constant 0 : index
    %244 = vector.load %arg4[%c0_126, %c0_127] : memref<72x512xf32, #tpu.memory_space<vmem>>, vector<8x512xf32>
    tpu.vector_store %arg4[%c0_126, %c0_127], %243 {strides = array<i32>} : memref<72x512xf32, #tpu.memory_space<vmem>>, vector<8x512xf32>,
    %c16_i32_128 = arith.constant 16 : i32
    %245 = tpu.dynamic_rotate %240 by %c16_i32_128 dim 1 : vector<8x512xf32>, i32 -> vector<8x512xf32>
    %246 = vector.broadcast %11 : vector<1x512xf32> to vector<8x512xf32>
    %247 = arith.mulf %245, %246 : vector<8x512xf32>
    %c8_129 = arith.constant 8 : index
    %c0_130 = arith.constant 0 : index
    %248 = vector.load %arg4[%c8_129, %c0_130] : memref<72x512xf32, #tpu.memory_space<vmem>>, vector<8x512xf32>
    tpu.vector_store %arg4[%c8_129, %c0_130], %247 {strides = array<i32>} : memref<72x512xf32, #tpu.memory_space<vmem>>, vector<8x512xf32>,
    %c15_i32_131 = arith.constant 15 : i32
    %249 = tpu.dynamic_rotate %240 by %c15_i32_131 dim 1 : vector<8x512xf32>, i32 -> vector<8x512xf32>
    %250 = vector.broadcast %28 : vector<1x512xf32> to vector<8x512xf32>
    %251 = arith.mulf %249, %250 : vector<8x512xf32>
    %c16_132 = arith.constant 16 : index
    %c0_133 = arith.constant 0 : index
    %252 = vector.load %arg4[%c16_132, %c0_133] : memref<72x512xf32, #tpu.memory_space<vmem>>, vector<8x512xf32>
    tpu.vector_store %arg4[%c16_132, %c0_133], %251 {strides = array<i32>} : memref<72x512xf32, #tpu.memory_space<vmem>>, vector<8x512xf32>,
    %c1_i32_134 = arith.constant 1 : i32
    %253 = tpu.dynamic_rotate %240 by %c1_i32_134 dim 1 : vector<8x512xf32>, i32 -> vector<8x512xf32>
    %254 = vector.broadcast %21 : vector<1x512xf32> to vector<8x512xf32>
    %255 = arith.mulf %253, %254 : vector<8x512xf32>
    %c24_135 = arith.constant 24 : index
    %c0_136 = arith.constant 0 : index
    %256 = vector.load %arg4[%c24_135, %c0_136] : memref<72x512xf32, #tpu.memory_space<vmem>>, vector<8x512xf32>
    tpu.vector_store %arg4[%c24_135, %c0_136], %255 {strides = array<i32>} : memref<72x512xf32, #tpu.memory_space<vmem>>, vector<8x512xf32>,
    %c32_137 = arith.constant 32 : index
    %c0_138 = arith.constant 0 : index
    %257 = vector.load %arg4[%c32_137, %c0_138] : memref<72x512xf32, #tpu.memory_space<vmem>>, vector<8x512xf32>
    tpu.vector_store %arg4[%c32_137, %c0_138], %240 {strides = array<i32>} : memref<72x512xf32, #tpu.memory_space<vmem>>, vector<8x512xf32>,
    %c511_i32_139 = arith.constant 511 : i32
    %258 = tpu.dynamic_rotate %240 by %c511_i32_139 dim 1 : vector<8x512xf32>, i32 -> vector<8x512xf32>
    %259 = vector.broadcast %26 : vector<1x512xf32> to vector<8x512xf32>
    %260 = arith.mulf %258, %259 : vector<8x512xf32>
    %c40_140 = arith.constant 40 : index
    %c0_141 = arith.constant 0 : index
    %261 = vector.load %arg4[%c40_140, %c0_141] : memref<72x512xf32, #tpu.memory_space<vmem>>, vector<8x512xf32>
    tpu.vector_store %arg4[%c40_140, %c0_141], %260 {strides = array<i32>} : memref<72x512xf32, #tpu.memory_space<vmem>>, vector<8x512xf32>,
    %c497_i32_142 = arith.constant 497 : i32
    %262 = tpu.dynamic_rotate %240 by %c497_i32_142 dim 1 : vector<8x512xf32>, i32 -> vector<8x512xf32>
    %263 = vector.broadcast %29 : vector<1x512xf32> to vector<8x512xf32>
    %264 = arith.mulf %262, %263 : vector<8x512xf32>
    %c48_143 = arith.constant 48 : index
    %c0_144 = arith.constant 0 : index
    %265 = vector.load %arg4[%c48_143, %c0_144] : memref<72x512xf32, #tpu.memory_space<vmem>>, vector<8x512xf32>
    tpu.vector_store %arg4[%c48_143, %c0_144], %264 {strides = array<i32>} : memref<72x512xf32, #tpu.memory_space<vmem>>, vector<8x512xf32>,
    %c496_i32_145 = arith.constant 496 : i32
    %266 = tpu.dynamic_rotate %240 by %c496_i32_145 dim 1 : vector<8x512xf32>, i32 -> vector<8x512xf32>
    %267 = vector.broadcast %16 : vector<1x512xf32> to vector<8x512xf32>
    %268 = arith.mulf %266, %267 : vector<8x512xf32>
    %c56_146 = arith.constant 56 : index
    %c0_147 = arith.constant 0 : index
    %269 = vector.load %arg4[%c56_146, %c0_147] : memref<72x512xf32, #tpu.memory_space<vmem>>, vector<8x512xf32>
    tpu.vector_store %arg4[%c56_146, %c0_147], %268 {strides = array<i32>} : memref<72x512xf32, #tpu.memory_space<vmem>>, vector<8x512xf32>,
    %c495_i32_148 = arith.constant 495 : i32
    %270 = tpu.dynamic_rotate %240 by %c495_i32_148 dim 1 : vector<8x512xf32>, i32 -> vector<8x512xf32>
    %271 = vector.broadcast %30 : vector<1x512xf32> to vector<8x512xf32>
    %272 = arith.mulf %270, %271 : vector<8x512xf32>
    %c64_149 = arith.constant 64 : index
    %c0_150 = arith.constant 0 : index
    %273 = vector.load %arg4[%c64_149, %c0_150] : memref<72x512xf32, #tpu.memory_space<vmem>>, vector<8x512xf32>
    tpu.vector_store %arg4[%c64_149, %c0_150], %272 {strides = array<i32>} : memref<72x512xf32, #tpu.memory_space<vmem>>, vector<8x512xf32>,
    %c24_151 = arith.constant 24 : index
    %c0_152 = arith.constant 0 : index
    %274 = vector.load %arg1[%c24_151, %c0_152] : memref<32x72xf32, #tpu.memory_space<vmem>>, vector<8x72xf32>
    %c0_153 = arith.constant 0 : index
    %c0_154 = arith.constant 0 : index
    %275 = vector.load %arg4[%c0_153, %c0_154] : memref<72x512xf32, #tpu.memory_space<vmem>>, vector<72x512xf32>
    %cst_155 = arith.constant dense<0.000000e+00> : vector<8x512xf32>
    %276 = tpu.matmul %274, %275, %cst_155 {dimension_numbers = #tpu.dot_dimension_numbers<[1], [0], [0], [1], [0, 0, 1, 1], [], []>} : vector<8x72xf32>, vector<72x512xf32>, vector<8x512xf32> -> vector<8x512xf32>
    %c0_156 = arith.constant 0 : index
    %c3_157 = arith.constant 3 : index
    %277 = vector.load %arg2[%c0_156, %c3_157] : memref<8x8xf32, #tpu.memory_space<vmem>>, vector<8x1xf32>
    %278 = vector.broadcast %277 : vector<8x1xf32> to vector<8x512xf32>
    %279 = arith.addf %276, %278 : vector<8x512xf32>
    %280 = vector.extract_strided_slice %279 {offsets = [0, 0], sizes = [1, 512], strides = [1, 1]} : vector<8x512xf32> to vector<1x512xf32>
    %c0_158 = arith.constant 0 : index
    %c0_159 = arith.constant 0 : index
    %281 = vector.load %arg3[%c0_158, %c0_159] : memref<1x512xf32, #tpu.memory_space<vmem>>, vector<1x512xf32>
    tpu.vector_store %arg3[%c0_158, %c0_159], %280 {strides = array<i32>} : memref<1x512xf32, #tpu.memory_space<vmem>>, vector<1x512xf32>,
    return
  }
}

</mosaic_0001>

<llo_original>
// kernel: cnn_encoder_forward.1
$region0: #{cnn_encoder_forward.1}
  #allocation0 [shape = 'u32[]', space=smem, size = 0x4, offset = 0x4, fixed_abs, tag = 'smem constant byte address 0x4 - core index']
  #allocation1 [shape = 'u32[144,128]{1,0:T(1,128)}', space=vmem, size = 0x12000, scoped, tag = 'internal scratch']
  #allocation2 [shape = 'f32[72,512]{1,0:T(8,128)}', space=vmem, size = 0x24000, scoped, tag = 'scratch operand']
  %s0 = inlined_call_operand.vmem [shape: f32[1,512], index: 0, kind: input, shape index: {}]
  %s1 = inlined_call_operand.vmem [shape: f32[32,72], index: 1, kind: input, shape index: {}]
  %s2 = inlined_call_operand.vmem [shape: f32[8,8], index: 2, kind: input, shape index: {}]
  %s3 = inlined_call_operand.vmem [shape: f32[1,512], index: 3, kind: output, shape index: {}]
  %s4 = sld [smem:[#allocation0]]
  $region22: #{cnn_encoder_forward.1} parent=0
    _
  %s6 = ssub.s32 1, %s4
  %s7 = scalar_select 0, %s6, %s4
  // Predicated region
  $region2: #{cnn_encoder_forward.1} parent=0 // pred_check
    _
  $region3: #{cnn_encoder_forward.1} parent=0 // pred_check_branch
    %9 = sbr.rel (0) target = $region5
  $region4: #{cnn_encoder_forward.1} parent=0 // pred_region
    _
  $region5: #{cnn_encoder_forward.1} parent=0 // pred_fallthru
    _
  // Predicated region
  $region6: #{cnn_encoder_forward.1} parent=0 // pred_check
    _
  $region7: #{cnn_encoder_forward.1} parent=0 // pred_check_branch
    %11 = sbr.rel (0) target = $region9
  $region8: #{cnn_encoder_forward.1} parent=0 // pred_region
    _
  $region9: #{cnn_encoder_forward.1} parent=0 // pred_fallthru
    _
  // Predicated region
  $region10: #{cnn_encoder_forward.1} parent=0 // pred_check
    _
  $region11: #{cnn_encoder_forward.1} parent=0 // pred_check_branch
    %13 = sbr.rel (0) target = $region13
  $region12: #{cnn_encoder_forward.1} parent=0 // pred_region
    _
  $region13: #{cnn_encoder_forward.1} parent=0 // pred_fallthru
    _
  %v14 = vlaneseq
  %v15 = vand.u32 %v14, 127
  %v16 = vadd.s32 %v15, 128
  %v17 = vadd.s32 %v15, 256
  %v18 = vadd.s32 %v15, 384
  %v19 = vand.u32 %v15, 255
  %v20 = vand.u32 %v16, 255
  %v21 = vand.u32 %v17, 255
  %v22 = vand.u32 %v18, 255
  %v23 = vshra.s32 %v19, 4
  %v24 = vshra.s32 %v20, 4
  %v25 = vshra.s32 %v21, 4
  %v26 = vshra.s32 %v22, 4
  %v27 = vand.u32 %v19, 15
  %v28 = vand.u32 %v20, 15
  %v29 = vand.u32 %v21, 15
  %v30 = vand.u32 %v22, 15
  %vm31 = vcmp.ge.s32.totalorder %v23, 1
  %vm32 = vcmp.ge.s32.totalorder %v24, 1
  %vm33 = vcmp.ge.s32.totalorder %v25, 1
  %vm34 = vcmp.ge.s32.totalorder %v26, 1
  %v35 = vsel %vm31, 1.0, 0.0
  %v36 = vsel %vm32, 1.0, 0.0
  %v37 = vsel %vm33, 1.0, 0.0
  %v38 = vsel %vm34, 1.0, 0.0
  %vm39 = vcmp.lt.s32.totalorder %v23, 15
  %vm40 = vcmp.lt.s32.totalorder %v24, 15
  %vm41 = vcmp.lt.s32.totalorder %v25, 15
  %vm42 = vcmp.lt.s32.totalorder %v26, 15
  %v43 = vsel %vm39, 1.0, 0.0
  %v44 = vsel %vm40, 1.0, 0.0
  %v45 = vsel %vm41, 1.0, 0.0
  %v46 = vsel %vm42, 1.0, 0.0
  %vm47 = vcmp.ge.s32.totalorder %v27, 1
  %vm48 = vcmp.ge.s32.totalorder %v28, 1
  %vm49 = vcmp.ge.s32.totalorder %v29, 1
  %vm50 = vcmp.ge.s32.totalorder %v30, 1
  %v51 = vsel %vm47, 1.0, 0.0
  %v52 = vsel %vm48, 1.0, 0.0
  %v53 = vsel %vm49, 1.0, 0.0
  %v54 = vsel %vm50, 1.0, 0.0
  %vm55 = vcmp.lt.s32.totalorder %v27, 15
  %vm56 = vcmp.lt.s32.totalorder %v28, 15
  %vm57 = vcmp.lt.s32.totalorder %v29, 15
  %vm58 = vcmp.lt.s32.totalorder %v30, 15
  %v59 = vsel %vm55, 1.0, 0.0
  %v60 = vsel %vm56, 1.0, 0.0
  %v61 = vsel %vm57, 1.0, 0.0
  %v62 = vsel %vm58, 1.0, 0.0
  %v63 = vmul.f32 %v35, %v51
  %v64 = vmul.f32 %v36, %v52
  %v65 = vmul.f32 %v37, %v53
  %v66 = vmul.f32 %v38, %v54
  %v67 = vmul.f32 %v35, %v59
  %v68 = vmul.f32 %v36, %v60
  %v69 = vmul.f32 %v37, %v61
  %v70 = vmul.f32 %v38, %v62
  %v71 = vmul.f32 %v43, %v51
  %v72 = vmul.f32 %v44, %v52
  %v73 = vmul.f32 %v45, %v53
  %v74 = vmul.f32 %v46, %v54
  %v75 = vmul.f32 %v43, %v59
  %v76 = vmul.f32 %v44, %v60
  %v77 = vmul.f32 %v45, %v61
  %v78 = vmul.f32 %v46, %v62
  %vm79 = vcmp.ge.s32.totalorder %v23, 2
  %vm80 = vcmp.ge.s32.totalorder %v24, 2
  %vm81 = vcmp.ge.s32.totalorder %v25, 2
  %vm82 = vcmp.ge.s32.totalorder %v26, 2
  %v83 = vsel %vm79, 1.0, 0.0
  %v84 = vsel %vm80, 1.0, 0.0
  %v85 = vsel %vm81, 1.0, 0.0
  %v86 = vsel %vm82, 1.0, 0.0
  %vm87 = vcmp.lt.s32.totalorder %v23, 14
  %vm88 = vcmp.lt.s32.totalorder %v24, 14
  %vm89 = vcmp.lt.s32.totalorder %v25, 14
  %vm90 = vcmp.lt.s32.totalorder %v26, 14
  %v91 = vsel %vm87, 1.0, 0.0
  %v92 = vsel %vm88, 1.0, 0.0
  %v93 = vsel %vm89, 1.0, 0.0
  %v94 = vsel %vm90, 1.0, 0.0
  %vm95 = vcmp.ge.s32.totalorder %v27, 2
  %vm96 = vcmp.ge.s32.totalorder %v28, 2
  %vm97 = vcmp.ge.s32.totalorder %v29, 2
  %vm98 = vcmp.ge.s32.totalorder %v30, 2
  %v99 = vsel %vm95, 1.0, 0.0
  %v100 = vsel %vm96, 1.0, 0.0
  %v101 = vsel %vm97, 1.0, 0.0
  %v102 = vsel %vm98, 1.0, 0.0
  %vm103 = vcmp.lt.s32.totalorder %v27, 14
  %vm104 = vcmp.lt.s32.totalorder %v28, 14
  %vm105 = vcmp.lt.s32.totalorder %v29, 14
  %vm106 = vcmp.lt.s32.totalorder %v30, 14
  %v107 = vsel %vm103, 1.0, 0.0
  %v108 = vsel %vm104, 1.0, 0.0
  %v109 = vsel %vm105, 1.0, 0.0
  %v110 = vsel %vm106, 1.0, 0.0
  %v111 = vmul.f32 %v83, %v99
  %v112 = vmul.f32 %v84, %v100
  %v113 = vmul.f32 %v85, %v101
  %v114 = vmul.f32 %v86, %v102
  %v115 = vmul.f32 %v83, %v107
  %v116 = vmul.f32 %v84, %v108
  %v117 = vmul.f32 %v85, %v109
  %v118 = vmul.f32 %v86, %v110
  %v119 = vmul.f32 %v91, %v99
  %v120 = vmul.f32 %v92, %v100
  %v121 = vmul.f32 %v93, %v101
  %v122 = vmul.f32 %v94, %v102
  %v123 = vmul.f32 %v91, %v107
  %v124 = vmul.f32 %v92, %v108
  %v125 = vmul.f32 %v93, %v109
  %v126 = vmul.f32 %v94, %v110
  %v127 = vld [vmem:[%s0] sm:$0xf]
  %128 = vst [vmem:[#allocation2 + $0x20] sm:$0xff] 0.0
  %129 = vst [vmem:[#allocation2 + $0x28] sm:$0xff] 0.0
  %130 = vst [vmem:[#allocation2 + $0x30] sm:$0xff] 0.0
  %131 = vst [vmem:[#allocation2 + $0x38] sm:$0xff] 0.0
  %v133 = vlaneseq
  %v134 = vshrl.u32 %v133, 7
  %v135 = vsub.s32 0, %v134
  %v136 = vrot.slane %v127, %v135
  %v137 = vlaneseq
  %v138 = vshrl.u32 %v137, 7
  %v139 = vsub.s32 1, %v138
  %v140 = vrot.slane %v127, %v139
  %v141 = vlaneseq
  %v142 = vshrl.u32 %v141, 7
  %v143 = vsub.s32 2, %v142
  %v144 = vrot.slane %v127, %v143
  %v145 = vlaneseq
  %v146 = vshrl.u32 %v145, 7
  %v147 = vsub.s32 3, %v146
  %v148 = vrot.slane %v127, %v147
  %153 = vrot.lane.b32.xlu0 %v136, 17
  %v154 = vpop.permute.xlu0 %153
  %155 = vrot.lane.b32.xlu0 %v140, 17
  %v156 = vpop.permute.xlu0 %155
  %157 = vrot.lane.b32.xlu0 %v144, 17
  %v158 = vpop.permute.xlu0 %157
  %159 = vrot.lane.b32.xlu0 %v148, 17
  %v160 = vpop.permute.xlu0 %159
  %vm161 = vcmp.lt.s32.totalorder %v15, 17
  %v162 = vsel %vm161, %v158, %v160
  %v163 = vsel %vm161, %v156, %v158
  %v164 = vsel %vm161, %v154, %v156
  %v165 = vsel %vm161, %v160, %v154
  %v166 = vmul.f32 %v165, %v63
  %v167 = vmul.f32 %v164, %v64
  %v168 = vmul.f32 %v163, %v65
  %v169 = vmul.f32 %v162, %v66
  %v174 = vcombine.low %v166, %v167
  %v175 = vcombine.low %v168, %v169
  %v177 = vunpack.c.l.s4 1966171168
  %v178 = vunpack.c.0.s8 %v177
  %v179 = vlaneseq
  %v180 = vshrl.u32 %v179, 7
  %v181 = vsub.s32 %v178, %v180
  %v182 = vrot.slane %v174, %v181
  %v184 = vunpack.c.l.s4 1966171168
  %v185 = vunpack.c.0.s8 %v184
  %v186 = vlaneseq
  %v187 = vshrl.u32 %v186, 7
  %v188 = vsub.s32 %v185, %v187
  %v189 = vrot.slane %v175, %v188
  %v190 = vcombine.low %v182, %v189
  %v192 = vunpack.c.l.s4 1966171168
  %v193 = vunpack.c.0.s8 %v192
  %v194 = vlaneseq
  %v195 = vshrl.u32 %v194, 7
  %v196 = vsub.s32 %v193, %v195
  %v197 = vrot.slane %v190, %v196
  %v199 = vlaneseq
  %vm200 = vcmp.ge.s32.totalorder %v199, 0
  %vm201 = vcmp.lt.s32.totalorder %v199, 512
  %vm202 = vmand %vm200, %vm201
  %203 = vst.msk [vmem:[#allocation2] ss:$8 sm:$0xf] %vm202, %v197
  %204 = vst.msk [vmem:[#allocation2] ss:$8 sm:$0x0] %vm202, %v197
  %205 = vrot.lane.b32.xlu0 %v136, 16
  %v206 = vpop.permute.xlu0 %205
  %207 = vrot.lane.b32.xlu0 %v140, 16
  %v208 = vpop.permute.xlu0 %207
  %209 = vrot.lane.b32.xlu0 %v144, 16
  %v210 = vpop.permute.xlu0 %209
  %211 = vrot.lane.b32.xlu0 %v148, 16
  %v212 = vpop.permute.xlu0 %211
  %vm213 = vcmp.lt.s32.totalorder %v15, 16
  %v214 = vsel %vm213, %v210, %v212
  %v215 = vsel %vm213, %v208, %v210
  %v216 = vsel %vm213, %v206, %v208
  %v217 = vsel %vm213, %v212, %v206
  %v218 = vmul.f32 %v217, %v35
  %v219 = vmul.f32 %v216, %v36
  %v220 = vmul.f32 %v215, %v37
  %v221 = vmul.f32 %v214, %v38
  %v226 = vcombine.low %v218, %v219
  %v227 = vcombine.low %v220, %v221
  %v229 = vunpack.c.l.s4 1966171168
  %v230 = vunpack.c.0.s8 %v229
  %v231 = vlaneseq
  %v232 = vshrl.u32 %v231, 7
  %v233 = vsub.s32 %v230, %v232
  %v234 = vrot.slane %v226, %v233
  %v236 = vunpack.c.l.s4 1966171168
  %v237 = vunpack.c.0.s8 %v236
  %v238 = vlaneseq
  %v239 = vshrl.u32 %v238, 7
  %v240 = vsub.s32 %v237, %v239
  %v241 = vrot.slane %v227, %v240
  %v242 = vcombine.low %v234, %v241
  %v244 = vunpack.c.l.s4 1966171168
  %v245 = vunpack.c.0.s8 %v244
  %v246 = vlaneseq
  %v247 = vshrl.u32 %v246, 7
  %v248 = vsub.s32 %v245, %v247
  %v249 = vrot.slane %v242, %v248
  %s251 = scalar_lea.vmem [#allocation2], 1
  %252 = vst.msk [vmem:[%s251] ss:$8 sm:$0xf] %vm202, %v249
  %253 = vst.msk [vmem:[%s251] ss:$8 sm:$0x0] %vm202, %v249
  %254 = vrot.lane.b32.xlu0 %v136, 15
  %v255 = vpop.permute.xlu0 %254
  %256 = vrot.lane.b32.xlu0 %v140, 15
  %v257 = vpop.permute.xlu0 %256
  %258 = vrot.lane.b32.xlu0 %v144, 15
  %v259 = vpop.permute.xlu0 %258
  %260 = vrot.lane.b32.xlu0 %v148, 15
  %v261 = vpop.permute.xlu0 %260
  %vm262 = vcmp.lt.s32.totalorder %v15, 15
  %v263 = vsel %vm262, %v259, %v261
  %v264 = vsel %vm262, %v257, %v259
  %v265 = vsel %vm262, %v255, %v257
  %v266 = vsel %vm262, %v261, %v255
  %v267 = vmul.f32 %v266, %v67
  %v268 = vmul.f32 %v265, %v68
  %v269 = vmul.f32 %v264, %v69
  %v270 = vmul.f32 %v263, %v70
  %v275 = vcombine.low %v267, %v268
  %v276 = vcombine.low %v269, %v270
  %v278 = vunpack.c.l.s4 1966171168
  %v279 = vunpack.c.0.s8 %v278
  %v280 = vlaneseq
  %v281 = vshrl.u32 %v280, 7
  %v282 = vsub.s32 %v279, %v281
  %v283 = vrot.slane %v275, %v282
  %v285 = vunpack.c.l.s4 1966171168
  %v286 = vunpack.c.0.s8 %v285
  %v287 = vlaneseq
  %v288 = vshrl.u32 %v287, 7
  %v289 = vsub.s32 %v286, %v288
  %v290 = vrot.slane %v276, %v289
  %v291 = vcombine.low %v283, %v290
  %v293 = vunpack.c.l.s4 1966171168
  %v294 = vunpack.c.0.s8 %v293
  %v295 = vlaneseq
  %v296 = vshrl.u32 %v295, 7
  %v297 = vsub.s32 %v294, %v296
  %v298 = vrot.slane %v291, %v297
  %s300 = scalar_lea.vmem [#allocation2], 2
  %301 = vst.msk [vmem:[%s300] ss:$8 sm:$0xf] %vm202, %v298
  %302 = vst.msk [vmem:[%s300] ss:$8 sm:$0x0] %vm202, %v298
  %303 = vrot.lane.b32.xlu0 %v136, 1
  %v304 = vpop.permute.xlu0 %303
  %305 = vrot.lane.b32.xlu0 %v140, 1
  %v306 = vpop.permute.xlu0 %305
  %307 = vrot.lane.b32.xlu0 %v144, 1
  %v308 = vpop.permute.xlu0 %307
  %309 = vrot.lane.b32.xlu0 %v148, 1
  %v310 = vpop.permute.xlu0 %309
  %vm311 = vcmp.lt.s32.totalorder %v15, 1
  %v312 = vsel %vm311, %v308, %v310
  %v313 = vsel %vm311, %v306, %v308
  %v314 = vsel %vm311, %v304, %v306
  %v315 = vsel %vm311, %v310, %v304
  %v316 = vmul.f32 %v315, %v51
  %v317 = vmul.f32 %v314, %v52
  %v318 = vmul.f32 %v313, %v53
  %v319 = vmul.f32 %v312, %v54
  %v324 = vcombine.low %v316, %v317
  %v325 = vcombine.low %v318, %v319
  %v327 = vunpack.c.l.s4 1966171168
  %v328 = vunpack.c.0.s8 %v327
  %v329 = vlaneseq
  %v330 = vshrl.u32 %v329, 7
  %v331 = vsub.s32 %v328, %v330
  %v332 = vrot.slane %v324, %v331
  %v334 = vunpack.c.l.s4 1966171168
  %v335 = vunpack.c.0.s8 %v334
  %v336 = vlaneseq
  %v337 = vshrl.u32 %v336, 7
  %v338 = vsub.s32 %v335, %v337
  %v339 = vrot.slane %v325, %v338
  %v340 = vcombine.low %v332, %v339
  %v342 = vunpack.c.l.s4 1966171168
  %v343 = vunpack.c.0.s8 %v342
  %v344 = vlaneseq
  %v345 = vshrl.u32 %v344, 7
  %v346 = vsub.s32 %v343, %v345
  %v347 = vrot.slane %v340, %v346
  %s349 = scalar_lea.vmem [#allocation2], 3
  %350 = vst.msk [vmem:[%s349] ss:$8 sm:$0xf] %vm202, %v347
  %351 = vst.msk [vmem:[%s349] ss:$8 sm:$0x0] %vm202, %v347
  %s352 = scalar_lea.vmem [#allocation2], 4
  %353 = vst.msk [vmem:[%s352] ss:$8 sm:$0xf] %vm202, %v127
  %354 = vst.msk [vmem:[%s352] ss:$8 sm:$0x0] %vm202, %v127
  %355 = vrot.lane.b32.xlu0 %v136, 127
  %v356 = vpop.permute.xlu0 %355
  %357 = vrot.lane.b32.xlu0 %v140, 127
  %v358 = vpop.permute.xlu0 %357
  %359 = vrot.lane.b32.xlu0 %v144, 127
  %v360 = vpop.permute.xlu0 %359
  %361 = vrot.lane.b32.xlu0 %v148, 127
  %v362 = vpop.permute.xlu0 %361
  %vm363 = vcmp.lt.s32.totalorder %v15, 127
  %v364 = vsel %vm363, %v360, %v362
  %v365 = vsel %vm363, %v358, %v360
  %v366 = vsel %vm363, %v356, %v358
  %v367 = vsel %vm363, %v362, %v356
  %v368 = vmul.f32 %v366, %v59
  %v369 = vmul.f32 %v365, %v60
  %v370 = vmul.f32 %v364, %v61
  %v371 = vmul.f32 %v367, %v62
  %v376 = vcombine.low %v368, %v369
  %v377 = vcombine.low %v370, %v371
  %v379 = vunpack.c.l.s4 1966171168
  %v380 = vunpack.c.0.s8 %v379
  %v381 = vlaneseq
  %v382 = vshrl.u32 %v381, 7
  %v383 = vsub.s32 %v380, %v382
  %v384 = vrot.slane %v376, %v383
  %v386 = vunpack.c.l.s4 1966171168
  %v387 = vunpack.c.0.s8 %v386
  %v388 = vlaneseq
  %v389 = vshrl.u32 %v388, 7
  %v390 = vsub.s32 %v387, %v389
  %v391 = vrot.slane %v377, %v390
  %v392 = vcombine.low %v384, %v391
  %v394 = vunpack.c.l.s4 1966171168
  %v395 = vunpack.c.0.s8 %v394
  %v396 = vlaneseq
  %v397 = vshrl.u32 %v396, 7
  %v398 = vsub.s32 %v395, %v397
  %v399 = vrot.slane %v392, %v398
  %s401 = scalar_lea.vmem [#allocation2], 5
  %402 = vst.msk [vmem:[%s401] ss:$8 sm:$0xf] %vm202, %v399
  %403 = vst.msk [vmem:[%s401] ss:$8 sm:$0x0] %vm202, %v399
  %404 = vrot.lane.b32.xlu0 %v136, 113
  %v405 = vpop.permute.xlu0 %404
  %406 = vrot.lane.b32.xlu0 %v140, 113
  %v407 = vpop.permute.xlu0 %406
  %408 = vrot.lane.b32.xlu0 %v144, 113
  %v409 = vpop.permute.xlu0 %408
  %410 = vrot.lane.b32.xlu0 %v148, 113
  %v411 = vpop.permute.xlu0 %410
  %vm412 = vcmp.lt.s32.totalorder %v15, 113
  %v413 = vsel %vm412, %v409, %v411
  %v414 = vsel %vm412, %v407, %v409
  %v415 = vsel %vm412, %v405, %v407
  %v416 = vsel %vm412, %v411, %v405
  %v417 = vmul.f32 %v415, %v71
  %v418 = vmul.f32 %v414, %v72
  %v419 = vmul.f32 %v413, %v73
  %v420 = vmul.f32 %v416, %v74
  %v425 = vcombine.low %v417, %v418
  %v426 = vcombine.low %v419, %v420
  %v428 = vunpack.c.l.s4 1966171168
  %v429 = vunpack.c.0.s8 %v428
  %v430 = vlaneseq
  %v431 = vshrl.u32 %v430, 7
  %v432 = vsub.s32 %v429, %v431
  %v433 = vrot.slane %v425, %v432
  %v435 = vunpack.c.l.s4 1966171168
  %v436 = vunpack.c.0.s8 %v435
  %v437 = vlaneseq
  %v438 = vshrl.u32 %v437, 7
  %v439 = vsub.s32 %v436, %v438
  %v440 = vrot.slane %v426, %v439
  %v441 = vcombine.low %v433, %v440
  %v443 = vunpack.c.l.s4 1966171168
  %v444 = vunpack.c.0.s8 %v443
  %v445 = vlaneseq
  %v446 = vshrl.u32 %v445, 7
  %v447 = vsub.s32 %v444, %v446
  %v448 = vrot.slane %v441, %v447
  %s450 = scalar_lea.vmem [#allocation2], 6
  %451 = vst.msk [vmem:[%s450] ss:$8 sm:$0xf] %vm202, %v448
  %452 = vst.msk [vmem:[%s450] ss:$8 sm:$0x0] %vm202, %v448
  %453 = vrot.lane.b32.xlu0 %v136, 112
  %v454 = vpop.permute.xlu0 %453
  %455 = vrot.lane.b32.xlu0 %v140, 112
  %v456 = vpop.permute.xlu0 %455
  %457 = vrot.lane.b32.xlu0 %v144, 112
  %v458 = vpop.permute.xlu0 %457
  %459 = vrot.lane.b32.xlu0 %v148, 112
  %v460 = vpop.permute.xlu0 %459
  %vm461 = vcmp.lt.s32.totalorder %v15, 112
  %v462 = vsel %vm461, %v458, %v460
  %v463 = vsel %vm461, %v456, %v458
  %v464 = vsel %vm461, %v454, %v456
  %v465 = vsel %vm461, %v460, %v454
  %v466 = vmul.f32 %v464, %v43
  %v467 = vmul.f32 %v463, %v44
  %v468 = vmul.f32 %v462, %v45
  %v469 = vmul.f32 %v465, %v46
  %v474 = vcombine.low %v466, %v467
  %v475 = vcombine.low %v468, %v469
  %v477 = vunpack.c.l.s4 1966171168
  %v478 = vunpack.c.0.s8 %v477
  %v479 = vlaneseq
  %v480 = vshrl.u32 %v479, 7
  %v481 = vsub.s32 %v478, %v480
  %v482 = vrot.slane %v474, %v481
  %v484 = vunpack.c.l.s4 1966171168
  %v485 = vunpack.c.0.s8 %v484
  %v486 = vlaneseq
  %v487 = vshrl.u32 %v486, 7
  %v488 = vsub.s32 %v485, %v487
  %v489 = vrot.slane %v475, %v488
  %v490 = vcombine.low %v482, %v489
  %v492 = vunpack.c.l.s4 1966171168
  %v493 = vunpack.c.0.s8 %v492
  %v494 = vlaneseq
  %v495 = vshrl.u32 %v494, 7
  %v496 = vsub.s32 %v493, %v495
  %v497 = vrot.slane %v490, %v496
  %s499 = scalar_lea.vmem [#allocation2], 7
  %500 = vst.msk [vmem:[%s499] ss:$8 sm:$0xf] %vm202, %v497
  %501 = vst.msk [vmem:[%s499] ss:$8 sm:$0x0] %vm202, %v497
  %502 = vrot.lane.b32.xlu0 %v136, 111
  %v503 = vpop.permute.xlu0 %502
  %504 = vrot.lane.b32.xlu0 %v140, 111
  %v505 = vpop.permute.xlu0 %504
  %506 = vrot.lane.b32.xlu0 %v144, 111
  %v507 = vpop.permute.xlu0 %506
  %508 = vrot.lane.b32.xlu0 %v148, 111
  %v509 = vpop.permute.xlu0 %508
  %vm510 = vcmp.lt.s32.totalorder %v15, 111
  %v511 = vsel %vm510, %v507, %v509
  %v512 = vsel %vm510, %v505, %v507
  %v513 = vsel %vm510, %v503, %v505
  %v514 = vsel %vm510, %v509, %v503
  %v515 = vmul.f32 %v513, %v75
  %v516 = vmul.f32 %v512, %v76
  %v517 = vmul.f32 %v511, %v77
  %v518 = vmul.f32 %v514, %v78
  %v523 = vcombine.low %v515, %v516
  %v524 = vcombine.low %v517, %v518
  %v526 = vunpack.c.l.s4 1966171168
  %v527 = vunpack.c.0.s8 %v526
  %v528 = vlaneseq
  %v529 = vshrl.u32 %v528, 7
  %v530 = vsub.s32 %v527, %v529
  %v531 = vrot.slane %v523, %v530
  %v533 = vunpack.c.l.s4 1966171168
  %v534 = vunpack.c.0.s8 %v533
  %v535 = vlaneseq
  %v536 = vshrl.u32 %v535, 7
  %v537 = vsub.s32 %v534, %v536
  %v538 = vrot.slane %v524, %v537
  %v539 = vcombine.low %v531, %v538
  %v541 = vunpack.c.l.s4 1966171168
  %v542 = vunpack.c.0.s8 %v541
  %v543 = vlaneseq
  %v544 = vshrl.u32 %v543, 7
  %v545 = vsub.s32 %v542, %v544
  %v546 = vrot.slane %v539, %v545
  %s548 = scalar_lea.vmem [#allocation2], 32
  %549 = vst.msk [vmem:[%s548] ss:$8 sm:$0xf] %vm202, %v546
  %550 = vst.msk [vmem:[%s548] ss:$8 sm:$0x0] %vm202, %v546
  %v551 = vld [vmem:[%s1] sm:$0xff]
  %v552 = vld [vmem:[#allocation2] sm:$0xff]
  %v553 = vld [vmem:[#allocation2 + $0x8] sm:$0xff]
  %v554 = vld [vmem:[#allocation2 + $0x10] sm:$0xff]
  %v555 = vld [vmem:[#allocation2 + $0x18] sm:$0xff]
  %v556 = vld [vmem:[#allocation2 + $0x20] sm:$0xff]
  %v557 = vld [vmem:[#allocation2 + $0x28] sm:$0xff]
  %v558 = vld [vmem:[#allocation2 + $0x30] sm:$0xff]
  %v559 = vld [vmem:[#allocation2 + $0x38] sm:$0xff]
  %v560 = vld [vmem:[%s2] sm:$0xff]
  %562 = vset.pattern.permute.xlu0 0
  %563 = vperm.xlu0 %562, %v560
  %v564 = vpop.permute.xlu0 %563
  %vm566 = vcmask 130048
  %v568 = vsel %vm566, %v551, 0
  %570 = vmatprep.subr.mxu0 %v553
  %571 = vmatpush1.msra.mxu0 %v552
  %572 = vmatprep.subr.mxu0 %v557
  %573 = vmatpush1.msra.mxu0 %v556
  %574 = vmatprep.subr.mxu0 0.0
  %575 = vmatpush1.msra.mxu0 0.0
  %576 = vmatprep.subr.mxu0 0.0
  %577 = vmatpush1.msra.mxu0 0.0
  %578 = vmatprep.subr.mxu0 0.0
  %579 = vmatpush1.msra.mxu0 0.0
  %580 = vmatprep.subr.mxu0 0.0
  %581 = vmatpush1.msra.mxu0 0.0
  %582 = vmatprep.subr.mxu0 0.0
  %583 = vmatpush1.msra.mxu0 0.0
  %584 = vmatprep.subr.mxu0 0.0
  %585 = vmatpush1.msra.mxu0 0.0
  %586 = vmatprep.subr.mxu0 0.0
  %587 = vmatpush1.msra.mxu0 0.0
  %588 = vmatprep.subr.mxu0 0.0
  %589 = vmatpush1.msra.mxu0 0.0
  %590 = vmatprep.subr.mxu0 0.0
  %591 = vmatpush1.msra.mxu0 0.0
  %592 = vmatprep.subr.mxu0 0.0
  %593 = vmatpush1.msra.mxu0 0.0
  %594 = vmatprep.subr.mxu0 0.0
  %595 = vmatpush1.msra.mxu0 0.0
  %596 = vmatprep.subr.mxu0 0.0
  %597 = vmatpush1.msra.mxu0 0.0
  %598 = vmatprep.subr.mxu0 0.0
  %599 = vmatpush1.msra.mxu0 0.0
  %600 = vmatprep.subr.mxu0 0.0
  %601 = vmatpush1.msra.mxu0 0.0
  %602 = vmatprep.subr.mxu0 0.0
  %603 = vmatpush1.msra.mxu0 0.0
  %604 = vmatprep.subr.mxu0 0.0
  %605 = vmatpush1.msra.mxu0 0.0
  %606 = vmatprep.subr.mxu0 0.0
  %607 = vmatpush1.msra.mxu0 0.0
  %608 = vmatprep.subr.mxu0 0.0
  %609 = vmatpush1.msra.mxu0 0.0
  %610 = vmatprep.subr.mxu0 0.0
  %611 = vmatpush1.msra.mxu0 0.0
  %612 = vmatprep.subr.mxu0 0.0
  %613 = vmatpush1.msra.mxu0 0.0
  %614 = vmatprep.subr.mxu0 0.0
  %615 = vmatpush1.msra.mxu0 0.0
  %616 = vmatprep.subr.mxu0 0.0
  %617 = vmatpush1.msra.mxu0 0.0
  %618 = vmatprep.subr.mxu0 0.0
  %619 = vmatpush1.msra.mxu0 0.0
  %620 = vmatprep.subr.mxu0 0.0
  %621 = vmatpush1.msra.mxu0 0.0
  %622 = vmatprep.subr.mxu0 0.0
  %623 = vmatpush1.msra.mxu0 0.0
  %624 = vmatprep.subr.mxu0 0.0
  %625 = vmatpush1.msra.mxu0 0.0
  %626 = vmatprep.subr.mxu0 0.0
  %627 = vmatpush1.msra.mxu0 0.0
  %628 = vmatprep.subr.mxu0 0.0
  %629 = vmatpush1.msra.mxu0 0.0
  %630 = vmatprep.subr.mxu0 0.0
  %631 = vmatpush1.msra.mxu0 0.0
  %632 = vmatprep.subr.mxu0 0.0
  %633 = vmatpush1.msra.mxu0 0.0
  %634 = vmatprep.mubr.f32.mxu0 0.0
  %635 = vmatmul.mubr.f32.gmra.mrb[0].mxu0 %v568
  %v636 = vpop.f32.mrb[0].mxu0
  %v637 = vadd.f32 %v564, %v636
  %v638 = vpop.f32.mrb[0].mxu0
  %v639 = vadd.f32 %v564, %v638
  %640 = vdwg.mxu0
  %641 = vmatprep.subr.mxu0 %v555
  %642 = vmatpush1.msra.mxu0 %v554
  %643 = vmatprep.subr.mxu0 %v559
  %644 = vmatpush1.msra.mxu0 %v558
  %645 = vmatprep.subr.mxu0 0.0
  %646 = vmatpush1.msra.mxu0 0.0
  %647 = vmatprep.subr.mxu0 0.0
  %648 = vmatpush1.msra.mxu0 0.0
  %649 = vmatprep.subr.mxu0 0.0
  %650 = vmatpush1.msra.mxu0 0.0
  %651 = vmatprep.subr.mxu0 0.0
  %652 = vmatpush1.msra.mxu0 0.0
  %653 = vmatprep.subr.mxu0 0.0
  %654 = vmatpush1.msra.mxu0 0.0
  %655 = vmatprep.subr.mxu0 0.0
  %656 = vmatpush1.msra.mxu0 0.0
  %657 = vmatprep.subr.mxu0 0.0
  %658 = vmatpush1.msra.mxu0 0.0
  %659 = vmatprep.subr.mxu0 0.0
  %660 = vmatpush1.msra.mxu0 0.0
  %661 = vmatprep.subr.mxu0 0.0
  %662 = vmatpush1.msra.mxu0 0.0
  %663 = vmatprep.subr.mxu0 0.0
  %664 = vmatpush1.msra.mxu0 0.0
  %665 = vmatprep.subr.mxu0 0.0
  %666 = vmatpush1.msra.mxu0 0.0
  %667 = vmatprep.subr.mxu0 0.0
  %668 = vmatpush1.msra.mxu0 0.0
  %669 = vmatprep.subr.mxu0 0.0
  %670 = vmatpush1.msra.mxu0 0.0
  %671 = vmatprep.subr.mxu0 0.0
  %672 = vmatpush1.msra.mxu0 0.0
  %673 = vmatprep.subr.mxu0 0.0
  %674 = vmatpush1.msra.mxu0 0.0
  %675 = vmatprep.subr.mxu0 0.0
  %676 = vmatpush1.msra.mxu0 0.0
  %677 = vmatprep.subr.mxu0 0.0
  %678 = vmatpush1.msra.mxu0 0.0
  %679 = vmatprep.subr.mxu0 0.0
  %680 = vmatpush1.msra.mxu0 0.0
  %681 = vmatprep.subr.mxu0 0.0
  %682 = vmatpush1.msra.mxu0 0.0
  %683 = vmatprep.subr.mxu0 0.0
  %684 = vmatpush1.msra.mxu0 0.0
  %685 = vmatprep.subr.mxu0 0.0
  %686 = vmatpush1.msra.mxu0 0.0
  %687 = vmatprep.subr.mxu0 0.0
  %688 = vmatpush1.msra.mxu0 0.0
  %689 = vmatprep.subr.mxu0 0.0
  %690 = vmatpush1.msra.mxu0 0.0
  %691 = vmatprep.subr.mxu0 0.0
  %692 = vmatpush1.msra.mxu0 0.0
  %693 = vmatprep.subr.mxu0 0.0
  %694 = vmatpush1.msra.mxu0 0.0
  %695 = vmatprep.subr.mxu0 0.0
  %696 = vmatpush1.msra.mxu0 0.0
  %697 = vmatprep.subr.mxu0 0.0
  %698 = vmatpush1.msra.mxu0 0.0
  %699 = vmatprep.subr.mxu0 0.0
  %700 = vmatpush1.msra.mxu0 0.0
  %701 = vmatprep.subr.mxu0 0.0
  %702 = vmatpush1.msra.mxu0 0.0
  %703 = vmatprep.subr.mxu0 0.0
  %704 = vmatpush1.msra.mxu0 0.0
  %705 = vmatprep.mubr.f32.mxu0 0.0
  %706 = vmatmul.mubr.f32.gmra.mrb[0].mxu0 %v568
  %v707 = vpop.f32.mrb[0].mxu0
  %v708 = vadd.f32 %v564, %v707
  %v709 = vpop.f32.mrb[0].mxu0
  %v710 = vadd.f32 %v564, %v709
  %711 = vdwg.mxu0
  %v712 = vmax.f32 %v637, 0.0
  %v713 = vmax.f32 %v639, 0.0
  %v714 = vmax.f32 %v708, 0.0
  %v715 = vmax.f32 %v710, 0.0
  %716 = vrot.lane.b32.xlu0 %v712, 127
  %v717 = vpop.permute.xlu0 %716
  %718 = vrot.lane.b32.xlu0 %v713, 127
  %v719 = vpop.permute.xlu0 %718
  %720 = vrot.lane.b32.xlu0 %v714, 127
  %v721 = vpop.permute.xlu0 %720
  %722 = vrot.lane.b32.xlu0 %v715, 127
  %v723 = vpop.permute.xlu0 %722
  %v724 = vsel %vm363, %v721, %v723
  %v725 = vsel %vm363, %v719, %v721
  %v726 = vsel %vm363, %v717, %v719
  %v727 = vsel %vm363, %v723, %v717
  %v728 = vmax.f32 %v712, %v726
  %v729 = vmax.f32 %v713, %v725
  %v730 = vmax.f32 %v714, %v724
  %v731 = vmax.f32 %v715, %v727
  %732 = vrot.lane.b32.xlu0 %v728, 112
  %v733 = vpop.permute.xlu0 %732
  %734 = vrot.lane.b32.xlu0 %v729, 112
  %v735 = vpop.permute.xlu0 %734
  %736 = vrot.lane.b32.xlu0 %v730, 112
  %v737 = vpop.permute.xlu0 %736
  %738 = vrot.lane.b32.xlu0 %v731, 112
  %v739 = vpop.permute.xlu0 %738
  %v740 = vsel %vm461, %v737, %v739
  %v741 = vsel %vm461, %v735, %v737
  %v742 = vsel %vm461, %v733, %v735
  %v743 = vsel %vm461, %v739, %v733
  %v744 = vmax.f32 %v728, %v742
  %v745 = vmax.f32 %v729, %v741
  %v746 = vmax.f32 %v730, %v740
  %v747 = vmax.f32 %v731, %v743
  %748 = vrot.lane.b32.xlu0 %v744, 34
  %v749 = vpop.permute.xlu0 %748
  %750 = vrot.lane.b32.xlu0 %v745, 34
  %v751 = vpop.permute.xlu0 %750
  %752 = vrot.lane.b32.xlu0 %v746, 34
  %v753 = vpop.permute.xlu0 %752
  %754 = vrot.lane.b32.xlu0 %v747, 34
  %v755 = vpop.permute.xlu0 %754
  %vm756 = vcmp.lt.s32.totalorder %v15, 34
  %v757 = vsel %vm756, %v753, %v755
  %v758 = vsel %vm756, %v751, %v753
  %v759 = vsel %vm756, %v749, %v751
  %v760 = vsel %vm756, %v755, %v749
  %v761 = vmul.f32 %v760, %v111
  %v762 = vmul.f32 %v759, %v112
  %v763 = vmul.f32 %v758, %v113
  %v764 = vmul.f32 %v757, %v114
  %765 = vst [vmem:[#allocation2] sm:$0xff] %v761
  %766 = vst [vmem:[#allocation2 + $0x8] sm:$0xff] %v762
  %767 = vst [vmem:[#allocation2 + $0x10] sm:$0xff] %v763
  %768 = vst [vmem:[#allocation2 + $0x18] sm:$0xff] %v764
  %769 = vrot.lane.b32.xlu0 %v744, 32
  %v770 = vpop.permute.xlu0 %769
  %771 = vrot.lane.b32.xlu0 %v745, 32
  %v772 = vpop.permute.xlu0 %771
  %773 = vrot.lane.b32.xlu0 %v746, 32
  %v774 = vpop.permute.xlu0 %773
  %775 = vrot.lane.b32.xlu0 %v747, 32
  %v776 = vpop.permute.xlu0 %775
  %vm777 = vcmp.lt.s32.totalorder %v15, 32
  %v778 = vsel %vm777, %v774, %v776
  %v779 = vsel %vm777, %v772, %v774
  %v780 = vsel %vm777, %v770, %v772
  %v781 = vsel %vm777, %v776, %v770
  %v782 = vmul.f32 %v781, %v83
  %v783 = vmul.f32 %v780, %v84
  %v784 = vmul.f32 %v779, %v85
  %v785 = vmul.f32 %v778, %v86
  %786 = vst [vmem:[#allocation2 + $0x20] sm:$0xff] %v782
  %787 = vst [vmem:[#allocation2 + $0x28] sm:$0xff] %v783
  %788 = vst [vmem:[#allocation2 + $0x30] sm:$0xff] %v784
  %789 = vst [vmem:[#allocation2 + $0x38] sm:$0xff] %v785
  %790 = vrot.lane.b32.xlu0 %v744, 30
  %v791 = vpop.permute.xlu0 %790
  %792 = vrot.lane.b32.xlu0 %v745, 30
  %v793 = vpop.permute.xlu0 %792
  %794 = vrot.lane.b32.xlu0 %v746, 30
  %v795 = vpop.permute.xlu0 %794
  %796 = vrot.lane.b32.xlu0 %v747, 30
  %v797 = vpop.permute.xlu0 %796
  %vm798 = vcmp.lt.s32.totalorder %v15, 30
  %v799 = vsel %vm798, %v795, %v797
  %v800 = vsel %vm798, %v793, %v795
  %v801 = vsel %vm798, %v791, %v793
  %v802 = vsel %vm798, %v797, %v791
  %v803 = vmul.f32 %v802, %v115
  %v804 = vmul.f32 %v801, %v116
  %v805 = vmul.f32 %v800, %v117
  %v806 = vmul.f32 %v799, %v118
  %807 = vst [vmem:[#allocation2 + $0x40] sm:$0xff] %v803
  %808 = vst [vmem:[#allocation2 + $0x48] sm:$0xff] %v804
  %809 = vst [vmem:[#allocation2 + $0x50] sm:$0xff] %v805
  %810 = vst [vmem:[#allocation2 + $0x58] sm:$0xff] %v806
  %811 = vrot.lane.b32.xlu0 %v744, 2
  %v812 = vpop.permute.xlu0 %811
  %813 = vrot.lane.b32.xlu0 %v745, 2
  %v814 = vpop.permute.xlu0 %813
  %815 = vrot.lane.b32.xlu0 %v746, 2
  %v816 = vpop.permute.xlu0 %815
  %817 = vrot.lane.b32.xlu0 %v747, 2
  %v818 = vpop.permute.xlu0 %817
  %vm819 = vcmp.lt.s32.totalorder %v15, 2
  %v820 = vsel %vm819, %v816, %v818
  %v821 = vsel %vm819, %v814, %v816
  %v822 = vsel %vm819, %v812, %v814
  %v823 = vsel %vm819, %v818, %v812
  %v824 = vmul.f32 %v823, %v99
  %v825 = vmul.f32 %v822, %v100
  %v826 = vmul.f32 %v821, %v101
  %v827 = vmul.f32 %v820, %v102
  %828 = vst [vmem:[#allocation2 + $0x60] sm:$0xff] %v824
  %829 = vst [vmem:[#allocation2 + $0x68] sm:$0xff] %v825
  %830 = vst [vmem:[#allocation2 + $0x70] sm:$0xff] %v826
  %831 = vst [vmem:[#allocation2 + $0x78] sm:$0xff] %v827
  %832 = vst [vmem:[#allocation2 + $0x80] sm:$0xff] %v744
  %833 = vst [vmem:[#allocation2 + $0x88] sm:$0xff] %v745
  %834 = vst [vmem:[#allocation2 + $0x90] sm:$0xff] %v746
  %835 = vst [vmem:[#allocation2 + $0x98] sm:$0xff] %v747
  %836 = vrot.lane.b32.xlu0 %v744, 126
  %v837 = vpop.permute.xlu0 %836
  %838 = vrot.lane.b32.xlu0 %v745, 126
  %v839 = vpop.permute.xlu0 %838
  %840 = vrot.lane.b32.xlu0 %v746, 126
  %v841 = vpop.permute.xlu0 %840
  %842 = vrot.lane.b32.xlu0 %v747, 126
  %v843 = vpop.permute.xlu0 %842
  %vm844 = vcmp.lt.s32.totalorder %v15, 126
  %v845 = vsel %vm844, %v841, %v843
  %v846 = vsel %vm844, %v839, %v841
  %v847 = vsel %vm844, %v837, %v839
  %v848 = vsel %vm844, %v843, %v837
  %v849 = vmul.f32 %v847, %v107
  %v850 = vmul.f32 %v846, %v108
  %v851 = vmul.f32 %v845, %v109
  %v852 = vmul.f32 %v848, %v110
  %853 = vst [vmem:[#allocation2 + $0xa0] sm:$0xff] %v849
  %854 = vst [vmem:[#allocation2 + $0xa8] sm:$0xff] %v850
  %855 = vst [vmem:[#allocation2 + $0xb0] sm:$0xff] %v851
  %856 = vst [vmem:[#allocation2 + $0xb8] sm:$0xff] %v852
  %857 = vrot.lane.b32.xlu0 %v744, 98
  %v858 = vpop.permute.xlu0 %857
  %859 = vrot.lane.b32.xlu0 %v745, 98
  %v860 = vpop.permute.xlu0 %859
  %861 = vrot.lane.b32.xlu0 %v746, 98
  %v862 = vpop.permute.xlu0 %861
  %863 = vrot.lane.b32.xlu0 %v747, 98
  %v864 = vpop.permute.xlu0 %863
  %vm865 = vcmp.lt.s32.totalorder %v15, 98
  %v866 = vsel %vm865, %v862, %v864
  %v867 = vsel %vm865, %v860, %v862
  %v868 = vsel %vm865, %v858, %v860
  %v869 = vsel %vm865, %v864, %v858
  %v870 = vmul.f32 %v868, %v119
  %v871 = vmul.f32 %v867, %v120
  %v872 = vmul.f32 %v866, %v121
  %v873 = vmul.f32 %v869, %v122
  %874 = vst [vmem:[#allocation2 + $0xc0] sm:$0xff] %v870
  %875 = vst [vmem:[#allocation2 + $0xc8] sm:$0xff] %v871
  %876 = vst [vmem:[#allocation2 + $0xd0] sm:$0xff] %v872
  %877 = vst [vmem:[#allocation2 + $0xd8] sm:$0xff] %v873
  %878 = vrot.lane.b32.xlu0 %v744, 96
  %v879 = vpop.permute.xlu0 %878
  %880 = vrot.lane.b32.xlu0 %v745, 96
  %v881 = vpop.permute.xlu0 %880
  %882 = vrot.lane.b32.xlu0 %v746, 96
  %v883 = vpop.permute.xlu0 %882
  %884 = vrot.lane.b32.xlu0 %v747, 96
  %v885 = vpop.permute.xlu0 %884
  %vm886 = vcmp.lt.s32.totalorder %v15, 96
  %v887 = vsel %vm886, %v883, %v885
  %v888 = vsel %vm886, %v881, %v883
  %v889 = vsel %vm886, %v879, %v881
  %v890 = vsel %vm886, %v885, %v879
  %v891 = vmul.f32 %v889, %v91
  %v892 = vmul.f32 %v888, %v92
  %v893 = vmul.f32 %v887, %v93
  %v894 = vmul.f32 %v890, %v94
  %895 = vst [vmem:[#allocation2 + $0xe0] sm:$0xff] %v891
  %896 = vst [vmem:[#allocation2 + $0xe8] sm:$0xff] %v892
  %897 = vst [vmem:[#allocation2 + $0xf0] sm:$0xff] %v893
  %898 = vst [vmem:[#allocation2 + $0xf8] sm:$0xff] %v894
  %899 = vrot.lane.b32.xlu0 %v744, 94
  %v900 = vpop.permute.xlu0 %899
  %901 = vrot.lane.b32.xlu0 %v745, 94
  %v902 = vpop.permute.xlu0 %901
  %903 = vrot.lane.b32.xlu0 %v746, 94
  %v904 = vpop.permute.xlu0 %903
  %905 = vrot.lane.b32.xlu0 %v747, 94
  %v906 = vpop.permute.xlu0 %905
  %vm907 = vcmp.lt.s32.totalorder %v15, 94
  %v908 = vsel %vm907, %v904, %v906
  %v909 = vsel %vm907, %v902, %v904
  %v910 = vsel %vm907, %v900, %v902
  %v911 = vsel %vm907, %v906, %v900
  %v912 = vmul.f32 %v910, %v123
  %v913 = vmul.f32 %v909, %v124
  %v914 = vmul.f32 %v908, %v125
  %v915 = vmul.f32 %v911, %v126
  %916 = vst [vmem:[#allocation2 + $0x100] sm:$0xff] %v912
  %917 = vst [vmem:[#allocation2 + $0x108] sm:$0xff] %v913
  %918 = vst [vmem:[#allocation2 + $0x110] sm:$0xff] %v914
  %919 = vst [vmem:[#allocation2 + $0x118] sm:$0xff] %v915
  %v920 = vld [vmem:[%s1 + $0x8] sm:$0xff]
  %v921 = vld [vmem:[#allocation2] sm:$0xff]
  %v922 = vld [vmem:[#allocation2 + $0x8] sm:$0xff]
  %v923 = vld [vmem:[#allocation2 + $0x10] sm:$0xff]
  %v924 = vld [vmem:[#allocation2 + $0x18] sm:$0xff]
  %v925 = vld [vmem:[#allocation2 + $0x20] sm:$0xff]
  %v926 = vld [vmem:[#allocation2 + $0x28] sm:$0xff]
  %v927 = vld [vmem:[#allocation2 + $0x30] sm:$0xff]
  %v928 = vld [vmem:[#allocation2 + $0x38] sm:$0xff]
  %v929 = vld [vmem:[#allocation2 + $0x40] sm:$0xff]
  %v930 = vld [vmem:[#allocation2 + $0x48] sm:$0xff]
  %v931 = vld [vmem:[#allocation2 + $0x50] sm:$0xff]
  %v932 = vld [vmem:[#allocation2 + $0x58] sm:$0xff]
  %v933 = vld [vmem:[#allocation2 + $0x60] sm:$0xff]
  %v934 = vld [vmem:[#allocation2 + $0x68] sm:$0xff]
  %v935 = vld [vmem:[#allocation2 + $0x70] sm:$0xff]
  %v936 = vld [vmem:[#allocation2 + $0x78] sm:$0xff]
  %v937 = vld [vmem:[#allocation2 + $0x80] sm:$0xff]
  %v938 = vld [vmem:[#allocation2 + $0x88] sm:$0xff]
  %v939 = vld [vmem:[#allocation2 + $0x90] sm:$0xff]
  %v940 = vld [vmem:[#allocation2 + $0x98] sm:$0xff]
  %v941 = vld [vmem:[#allocation2 + $0xa0] sm:$0xff]
  %v942 = vld [vmem:[#allocation2 + $0xa8] sm:$0xff]
  %v943 = vld [vmem:[#allocation2 + $0xb0] sm:$0xff]
  %v944 = vld [vmem:[#allocation2 + $0xb8] sm:$0xff]
  %v945 = vld [vmem:[#allocation2 + $0xc0] sm:$0xff]
  %v946 = vld [vmem:[#allocation2 + $0xc8] sm:$0xff]
  %v947 = vld [vmem:[#allocation2 + $0xd0] sm:$0xff]
  %v948 = vld [vmem:[#allocation2 + $0xd8] sm:$0xff]
  %v949 = vld [vmem:[#allocation2 + $0xe0] sm:$0xff]
  %v950 = vld [vmem:[#allocation2 + $0xe8] sm:$0xff]
  %v951 = vld [vmem:[#allocation2 + $0xf0] sm:$0xff]
  %v952 = vld [vmem:[#allocation2 + $0xf8] sm:$0xff]
  %v953 = vld [vmem:[#allocation2 + $0x100] sm:$0xff]
  %v954 = vld [vmem:[#allocation2 + $0x108] sm:$0xff]
  %v955 = vld [vmem:[#allocation2 + $0x110] sm:$0xff]
  %v956 = vld [vmem:[#allocation2 + $0x118] sm:$0xff]
  %v957 = vld [vmem:[%s2] sm:$0xff]
  %959 = vset.pattern.permute.xlu0 1
  %960 = vperm.xlu0 %959, %v957
  %v961 = vpop.permute.xlu0 %960
  %vm963 = vcmask 588800
  %v965 = vsel %vm963, %v920, 0
  %967 = vmatprep.subr.mxu0 %v922
  %968 = vmatpush1.msra.mxu0 %v921
  %969 = vmatprep.subr.mxu0 %v926
  %970 = vmatpush1.msra.mxu0 %v925
  %971 = vmatprep.subr.mxu0 %v930
  %972 = vmatpush1.msra.mxu0 %v929
  %973 = vmatprep.subr.mxu0 %v934
  %974 = vmatpush1.msra.mxu0 %v933
  %975 = vmatprep.subr.mxu0 %v938
  %976 = vmatpush1.msra.mxu0 %v937
  %977 = vmatprep.subr.mxu0 %v942
  %978 = vmatpush1.msra.mxu0 %v941
  %979 = vmatprep.subr.mxu0 %v946
  %980 = vmatpush1.msra.mxu0 %v945
  %981 = vmatprep.subr.mxu0 %v950
  %982 = vmatpush1.msra.mxu0 %v949
  %983 = vmatprep.subr.mxu0 %v954
  %984 = vmatpush1.msra.mxu0 %v953
  %985 = vmatprep.subr.mxu0 0.0
  %986 = vmatpush1.msra.mxu0 0.0
  %987 = vmatprep.subr.mxu0 0.0
  %988 = vmatpush1.msra.mxu0 0.0
  %989 = vmatprep.subr.mxu0 0.0
  %990 = vmatpush1.msra.mxu0 0.0
  %991 = vmatprep.subr.mxu0 0.0
  %992 = vmatpush1.msra.mxu0 0.0
  %993 = vmatprep.subr.mxu0 0.0
  %994 = vmatpush1.msra.mxu0 0.0
  %995 = vmatprep.subr.mxu0 0.0
  %996 = vmatpush1.msra.mxu0 0.0
  %997 = vmatprep.subr.mxu0 0.0
  %998 = vmatpush1.msra.mxu0 0.0
  %999 = vmatprep.subr.mxu0 0.0
  %1000 = vmatpush1.msra.mxu0 0.0
  %1001 = vmatprep.subr.mxu0 0.0
  %1002 = vmatpush1.msra.mxu0 0.0
  %1003 = vmatprep.subr.mxu0 0.0
  %1004 = vmatpush1.msra.mxu0 0.0
  %1005 = vmatprep.subr.mxu0 0.0
  %1006 = vmatpush1.msra.mxu0 0.0
  %1007 = vmatprep.subr.mxu0 0.0
  %1008 = vmatpush1.msra.mxu0 0.0
  %1009 = vmatprep.subr.mxu0 0.0
  %1010 = vmatpush1.msra.mxu0 0.0
  %1011 = vmatprep.subr.mxu0 0.0
  %1012 = vmatpush1.msra.mxu0 0.0
  %1013 = vmatprep.subr.mxu0 0.0
  %1014 = vmatpush1.msra.mxu0 0.0
  %1015 = vmatprep.subr.mxu0 0.0
  %1016 = vmatpush1.msra.mxu0 0.0
  %1017 = vmatprep.subr.mxu0 0.0
  %1018 = vmatpush1.msra.mxu0 0.0
  %1019 = vmatprep.subr.mxu0 0.0
  %1020 = vmatpush1.msra.mxu0 0.0
  %1021 = vmatprep.subr.mxu0 0.0
  %1022 = vmatpush1.msra.mxu0 0.0
  %1023 = vmatprep.subr.mxu0 0.0
  %1024 = vmatpush1.msra.mxu0 0.0
  %1025 = vmatprep.subr.mxu0 0.0
  %1026 = vmatpush1.msra.mxu0 0.0
  %1027 = vmatprep.subr.mxu0 0.0
  %1028 = vmatpush1.msra.mxu0 0.0
  %1029 = vmatprep.subr.mxu0 0.0
  %1030 = vmatpush1.msra.mxu0 0.0
  %1031 = vmatprep.mubr.f32.mxu0 0.0
  %1032 = vmatmul.mubr.f32.gmra.mrb[0].mxu0 %v965
  %v1033 = vpop.f32.mrb[0].mxu0
  %v1034 = vadd.f32 %v961, %v1033
  %v1035 = vpop.f32.mrb[0].mxu0
  %v1036 = vadd.f32 %v961, %v1035
  %1037 = vdwg.mxu0
  %1038 = vmatprep.subr.mxu0 %v924
  %1039 = vmatpush1.msra.mxu0 %v923
  %1040 = vmatprep.subr.mxu0 %v928
  %1041 = vmatpush1.msra.mxu0 %v927
  %1042 = vmatprep.subr.mxu0 %v932
  %1043 = vmatpush1.msra.mxu0 %v931
  %1044 = vmatprep.subr.mxu0 %v936
  %1045 = vmatpush1.msra.mxu0 %v935
  %1046 = vmatprep.subr.mxu0 %v940
  %1047 = vmatpush1.msra.mxu0 %v939
  %1048 = vmatprep.subr.mxu0 %v944
  %1049 = vmatpush1.msra.mxu0 %v943
  %1050 = vmatprep.subr.mxu0 %v948
  %1051 = vmatpush1.msra.mxu0 %v947
  %1052 = vmatprep.subr.mxu0 %v952
  %1053 = vmatpush1.msra.mxu0 %v951
  %1054 = vmatprep.subr.mxu0 %v956
  %1055 = vmatpush1.msra.mxu0 %v955
  %1056 = vmatprep.subr.mxu0 0.0
  %1057 = vmatpush1.msra.mxu0 0.0
  %1058 = vmatprep.subr.mxu0 0.0
  %1059 = vmatpush1.msra.mxu0 0.0
  %1060 = vmatprep.subr.mxu0 0.0
  %1061 = vmatpush1.msra.mxu0 0.0
  %1062 = vmatprep.subr.mxu0 0.0
  %1063 = vmatpush1.msra.mxu0 0.0
  %1064 = vmatprep.subr.mxu0 0.0
  %1065 = vmatpush1.msra.mxu0 0.0
  %1066 = vmatprep.subr.mxu0 0.0
  %1067 = vmatpush1.msra.mxu0 0.0
  %1068 = vmatprep.subr.mxu0 0.0
  %1069 = vmatpush1.msra.mxu0 0.0
  %1070 = vmatprep.subr.mxu0 0.0
  %1071 = vmatpush1.msra.mxu0 0.0
  %1072 = vmatprep.subr.mxu0 0.0
  %1073 = vmatpush1.msra.mxu0 0.0
  %1074 = vmatprep.subr.mxu0 0.0
  %1075 = vmatpush1.msra.mxu0 0.0
  %1076 = vmatprep.subr.mxu0 0.0
  %1077 = vmatpush1.msra.mxu0 0.0
  %1078 = vmatprep.subr.mxu0 0.0
  %1079 = vmatpush1.msra.mxu0 0.0
  %1080 = vmatprep.subr.mxu0 0.0
  %1081 = vmatpush1.msra.mxu0 0.0
  %1082 = vmatprep.subr.mxu0 0.0
  %1083 = vmatpush1.msra.mxu0 0.0
  %1084 = vmatprep.subr.mxu0 0.0
  %1085 = vmatpush1.msra.mxu0 0.0
  %1086 = vmatprep.subr.mxu0 0.0
  %1087 = vmatpush1.msra.mxu0 0.0
  %1088 = vmatprep.subr.mxu0 0.0
  %1089 = vmatpush1.msra.mxu0 0.0
  %1090 = vmatprep.subr.mxu0 0.0
  %1091 = vmatpush1.msra.mxu0 0.0
  %1092 = vmatprep.subr.mxu0 0.0
  %1093 = vmatpush1.msra.mxu0 0.0
  %1094 = vmatprep.subr.mxu0 0.0
  %1095 = vmatpush1.msra.mxu0 0.0
  %1096 = vmatprep.subr.mxu0 0.0
  %1097 = vmatpush1.msra.mxu0 0.0
  %1098 = vmatprep.subr.mxu0 0.0
  %1099 = vmatpush1.msra.mxu0 0.0
  %1100 = vmatprep.subr.mxu0 0.0
  %1101 = vmatpush1.msra.mxu0 0.0
  %1102 = vmatprep.mubr.f32.mxu0 0.0
  %1103 = vmatmul.mubr.f32.gmra.mrb[0].mxu0 %v965
  %v1104 = vpop.f32.mrb[0].mxu0
  %v1105 = vadd.f32 %v961, %v1104
  %v1106 = vpop.f32.mrb[0].mxu0
  %v1107 = vadd.f32 %v961, %v1106
  %1108 = vdwg.mxu0
  %v1109 = vmax.f32 %v1034, 0.0
  %v1110 = vmax.f32 %v1036, 0.0
  %v1111 = vmax.f32 %v1105, 0.0
  %v1112 = vmax.f32 %v1107, 0.0
  %1113 = vrot.lane.b32.xlu0 %v1109, 126
  %v1114 = vpop.permute.xlu0 %1113
  %1115 = vrot.lane.b32.xlu0 %v1110, 126
  %v1116 = vpop.permute.xlu0 %1115
  %1117 = vrot.lane.b32.xlu0 %v1111, 126
  %v1118 = vpop.permute.xlu0 %1117
  %1119 = vrot.lane.b32.xlu0 %v1112, 126
  %v1120 = vpop.permute.xlu0 %1119
  %v1121 = vsel %vm844, %v1118, %v1120
  %v1122 = vsel %vm844, %v1116, %v1118
  %v1123 = vsel %vm844, %v1114, %v1116
  %v1124 = vsel %vm844, %v1120, %v1114
  %v1125 = vmax.f32 %v1109, %v1123
  %v1126 = vmax.f32 %v1110, %v1122
  %v1127 = vmax.f32 %v1111, %v1121
  %v1128 = vmax.f32 %v1112, %v1124
  %1129 = vrot.lane.b32.xlu0 %v1125, 96
  %v1130 = vpop.permute.xlu0 %1129
  %1131 = vrot.lane.b32.xlu0 %v1126, 96
  %v1132 = vpop.permute.xlu0 %1131
  %1133 = vrot.lane.b32.xlu0 %v1127, 96
  %v1134 = vpop.permute.xlu0 %1133
  %1135 = vrot.lane.b32.xlu0 %v1128, 96
  %v1136 = vpop.permute.xlu0 %1135
  %v1137 = vsel %vm886, %v1134, %v1136
  %v1138 = vsel %vm886, %v1132, %v1134
  %v1139 = vsel %vm886, %v1130, %v1132
  %v1140 = vsel %vm886, %v1136, %v1130
  %v1141 = vmax.f32 %v1125, %v1139
  %v1142 = vmax.f32 %v1126, %v1138
  %v1143 = vmax.f32 %v1127, %v1137
  %v1144 = vmax.f32 %v1128, %v1140
  %v1145 = vand.u32 %v27, 3
  %v1146 = vand.u32 %v28, 3
  %v1147 = vand.u32 %v29, 3
  %v1148 = vand.u32 %v30, 3
  %vm1149 = vcmp.ge.s32.totalorder %v1145, 2
  %vm1150 = vcmp.ge.s32.totalorder %v1146, 2
  %vm1151 = vcmp.ge.s32.totalorder %v1147, 2
  %vm1152 = vcmp.ge.s32.totalorder %v1148, 2
  %v1153 = vsel %vm1149, 1.0, 0.0
  %v1154 = vsel %vm1150, 1.0, 0.0
  %v1155 = vsel %vm1151, 1.0, 0.0
  %v1156 = vsel %vm1152, 1.0, 0.0
  %v1157 = vand.u32 %v23, 3
  %v1158 = vand.u32 %v24, 3
  %v1159 = vand.u32 %v25, 3
  %v1160 = vand.u32 %v26, 3
  %vm1161 = vcmp.ge.s32.totalorder %v1157, 2
  %vm1162 = vcmp.ge.s32.totalorder %v1158, 2
  %vm1163 = vcmp.ge.s32.totalorder %v1159, 2
  %vm1164 = vcmp.ge.s32.totalorder %v1160, 2
  %v1165 = vsel %vm1161, 1.0, 0.0
  %v1166 = vsel %vm1162, 1.0, 0.0
  %v1167 = vsel %vm1163, 1.0, 0.0
  %v1168 = vsel %vm1164, 1.0, 0.0
  %v1169 = vsub.f32 1.0, %v1153
  %v1170 = vsub.f32 1.0, %v1154
  %v1171 = vsub.f32 1.0, %v1155
  %v1172 = vsub.f32 1.0, %v1156
  %v1173 = vmul.f32 %v1141, %v1169
  %v1174 = vmul.f32 %v1142, %v1170
  %v1175 = vmul.f32 %v1143, %v1171
  %v1176 = vmul.f32 %v1144, %v1172
  %1177 = vrot.lane.b32.xlu0 %v1141, 2
  %v1178 = vpop.permute.xlu0 %1177
  %1179 = vrot.lane.b32.xlu0 %v1142, 2
  %v1180 = vpop.permute.xlu0 %1179
  %1181 = vrot.lane.b32.xlu0 %v1143, 2
  %v1182 = vpop.permute.xlu0 %1181
  %1183 = vrot.lane.b32.xlu0 %v1144, 2
  %v1184 = vpop.permute.xlu0 %1183
  %v1185 = vsel %vm819, %v1182, %v1184
  %v1186 = vsel %vm819, %v1180, %v1182
  %v1187 = vsel %vm819, %v1178, %v1180
  %v1188 = vsel %vm819, %v1184, %v1178
  %v1189 = vmul.f32 %v1188, %v1153
  %v1190 = vmul.f32 %v1187, %v1154
  %v1191 = vmul.f32 %v1186, %v1155
  %v1192 = vmul.f32 %v1185, %v1156
  %v1193 = vadd.f32 %v1173, %v1189
  %v1194 = vadd.f32 %v1174, %v1190
  %v1195 = vadd.f32 %v1175, %v1191
  %v1196 = vadd.f32 %v1176, %v1192
  %v1197 = vsub.f32 1.0, %v1165
  %v1198 = vsub.f32 1.0, %v1166
  %v1199 = vsub.f32 1.0, %v1167
  %v1200 = vsub.f32 1.0, %v1168
  %v1201 = vmul.f32 %v1193, %v1197
  %v1202 = vmul.f32 %v1194, %v1198
  %v1203 = vmul.f32 %v1195, %v1199
  %v1204 = vmul.f32 %v1196, %v1200
  %1205 = vrot.lane.b32.xlu0 %v1193, 32
  %v1206 = vpop.permute.xlu0 %1205
  %1207 = vrot.lane.b32.xlu0 %v1194, 32
  %v1208 = vpop.permute.xlu0 %1207
  %1209 = vrot.lane.b32.xlu0 %v1195, 32
  %v1210 = vpop.permute.xlu0 %1209
  %1211 = vrot.lane.b32.xlu0 %v1196, 32
  %v1212 = vpop.permute.xlu0 %1211
  %v1213 = vsel %vm777, %v1210, %v1212
  %v1214 = vsel %vm777, %v1208, %v1210
  %v1215 = vsel %vm777, %v1206, %v1208
  %v1216 = vsel %vm777, %v1212, %v1206
  %v1217 = vmul.f32 %v1216, %v1165
  %v1218 = vmul.f32 %v1215, %v1166
  %v1219 = vmul.f32 %v1214, %v1167
  %v1220 = vmul.f32 %v1213, %v1168
  %v1221 = vadd.f32 %v1201, %v1217
  %v1222 = vadd.f32 %v1202, %v1218
  %v1223 = vadd.f32 %v1203, %v1219
  %v1224 = vadd.f32 %v1204, %v1220
  %1225 = vrot.lane.b32.xlu0 %v1221, 34
  %v1226 = vpop.permute.xlu0 %1225
  %1227 = vrot.lane.b32.xlu0 %v1222, 34
  %v1228 = vpop.permute.xlu0 %1227
  %1229 = vrot.lane.b32.xlu0 %v1223, 34
  %v1230 = vpop.permute.xlu0 %1229
  %1231 = vrot.lane.b32.xlu0 %v1224, 34
  %v1232 = vpop.permute.xlu0 %1231
  %v1233 = vsel %vm756, %v1230, %v1232
  %v1234 = vsel %vm756, %v1228, %v1230
  %v1235 = vsel %vm756, %v1226, %v1228
  %v1236 = vsel %vm756, %v1232, %v1226
  %v1237 = vmul.f32 %v1236, %v111
  %v1238 = vmul.f32 %v1235, %v112
  %v1239 = vmul.f32 %v1234, %v113
  %v1240 = vmul.f32 %v1233, %v114
  %1241 = vst [vmem:[#allocation2] sm:$0xff] %v1237
  %1242 = vst [vmem:[#allocation2 + $0x8] sm:$0xff] %v1238
  %1243 = vst [vmem:[#allocation2 + $0x10] sm:$0xff] %v1239
  %1244 = vst [vmem:[#allocation2 + $0x18] sm:$0xff] %v1240
  %1245 = vrot.lane.b32.xlu0 %v1221, 32
  %v1246 = vpop.permute.xlu0 %1245
  %1247 = vrot.lane.b32.xlu0 %v1222, 32
  %v1248 = vpop.permute.xlu0 %1247
  %1249 = vrot.lane.b32.xlu0 %v1223, 32
  %v1250 = vpop.permute.xlu0 %1249
  %1251 = vrot.lane.b32.xlu0 %v1224, 32
  %v1252 = vpop.permute.xlu0 %1251
  %v1253 = vsel %vm777, %v1250, %v1252
  %v1254 = vsel %vm777, %v1248, %v1250
  %v1255 = vsel %vm777, %v1246, %v1248
  %v1256 = vsel %vm777, %v1252, %v1246
  %v1257 = vmul.f32 %v1256, %v83
  %v1258 = vmul.f32 %v1255, %v84
  %v1259 = vmul.f32 %v1254, %v85
  %v1260 = vmul.f32 %v1253, %v86
  %1261 = vst [vmem:[#allocation2 + $0x20] sm:$0xff] %v1257
  %1262 = vst [vmem:[#allocation2 + $0x28] sm:$0xff] %v1258
  %1263 = vst [vmem:[#allocation2 + $0x30] sm:$0xff] %v1259
  %1264 = vst [vmem:[#allocation2 + $0x38] sm:$0xff] %v1260
  %1265 = vrot.lane.b32.xlu0 %v1221, 30
  %v1266 = vpop.permute.xlu0 %1265
  %1267 = vrot.lane.b32.xlu0 %v1222, 30
  %v1268 = vpop.permute.xlu0 %1267
  %1269 = vrot.lane.b32.xlu0 %v1223, 30
  %v1270 = vpop.permute.xlu0 %1269
  %1271 = vrot.lane.b32.xlu0 %v1224, 30
  %v1272 = vpop.permute.xlu0 %1271
  %v1273 = vsel %vm798, %v1270, %v1272
  %v1274 = vsel %vm798, %v1268, %v1270
  %v1275 = vsel %vm798, %v1266, %v1268
  %v1276 = vsel %vm798, %v1272, %v1266
  %v1277 = vmul.f32 %v1276, %v115
  %v1278 = vmul.f32 %v1275, %v116
  %v1279 = vmul.f32 %v1274, %v117
  %v1280 = vmul.f32 %v1273, %v118
  %1281 = vst [vmem:[#allocation2 + $0x40] sm:$0xff] %v1277
  %1282 = vst [vmem:[#allocation2 + $0x48] sm:$0xff] %v1278
  %1283 = vst [vmem:[#allocation2 + $0x50] sm:$0xff] %v1279
  %1284 = vst [vmem:[#allocation2 + $0x58] sm:$0xff] %v1280
  %1285 = vrot.lane.b32.xlu0 %v1221, 2
  %v1286 = vpop.permute.xlu0 %1285
  %1287 = vrot.lane.b32.xlu0 %v1222, 2
  %v1288 = vpop.permute.xlu0 %1287
  %1289 = vrot.lane.b32.xlu0 %v1223, 2
  %v1290 = vpop.permute.xlu0 %1289
  %1291 = vrot.lane.b32.xlu0 %v1224, 2
  %v1292 = vpop.permute.xlu0 %1291
  %v1293 = vsel %vm819, %v1290, %v1292
  %v1294 = vsel %vm819, %v1288, %v1290
  %v1295 = vsel %vm819, %v1286, %v1288
  %v1296 = vsel %vm819, %v1292, %v1286
  %v1297 = vmul.f32 %v1296, %v99
  %v1298 = vmul.f32 %v1295, %v100
  %v1299 = vmul.f32 %v1294, %v101
  %v1300 = vmul.f32 %v1293, %v102
  %1301 = vst [vmem:[#allocation2 + $0x60] sm:$0xff] %v1297
  %1302 = vst [vmem:[#allocation2 + $0x68] sm:$0xff] %v1298
  %1303 = vst [vmem:[#allocation2 + $0x70] sm:$0xff] %v1299
  %1304 = vst [vmem:[#allocation2 + $0x78] sm:$0xff] %v1300
  %1305 = vst [vmem:[#allocation2 + $0x80] sm:$0xff] %v1221
  %1306 = vst [vmem:[#allocation2 + $0x88] sm:$0xff] %v1222
  %1307 = vst [vmem:[#allocation2 + $0x90] sm:$0xff] %v1223
  %1308 = vst [vmem:[#allocation2 + $0x98] sm:$0xff] %v1224
  %1309 = vrot.lane.b32.xlu0 %v1221, 126
  %v1310 = vpop.permute.xlu0 %1309
  %1311 = vrot.lane.b32.xlu0 %v1222, 126
  %v1312 = vpop.permute.xlu0 %1311
  %1313 = vrot.lane.b32.xlu0 %v1223, 126
  %v1314 = vpop.permute.xlu0 %1313
  %1315 = vrot.lane.b32.xlu0 %v1224, 126
  %v1316 = vpop.permute.xlu0 %1315
  %v1317 = vsel %vm844, %v1314, %v1316
  %v1318 = vsel %vm844, %v1312, %v1314
  %v1319 = vsel %vm844, %v1310, %v1312
  %v1320 = vsel %vm844, %v1316, %v1310
  %v1321 = vmul.f32 %v1319, %v107
  %v1322 = vmul.f32 %v1318, %v108
  %v1323 = vmul.f32 %v1317, %v109
  %v1324 = vmul.f32 %v1320, %v110
  %1325 = vst [vmem:[#allocation2 + $0xa0] sm:$0xff] %v1321
  %1326 = vst [vmem:[#allocation2 + $0xa8] sm:$0xff] %v1322
  %1327 = vst [vmem:[#allocation2 + $0xb0] sm:$0xff] %v1323
  %1328 = vst [vmem:[#allocation2 + $0xb8] sm:$0xff] %v1324
  %1329 = vrot.lane.b32.xlu0 %v1221, 98
  %v1330 = vpop.permute.xlu0 %1329
  %1331 = vrot.lane.b32.xlu0 %v1222, 98
  %v1332 = vpop.permute.xlu0 %1331
  %1333 = vrot.lane.b32.xlu0 %v1223, 98
  %v1334 = vpop.permute.xlu0 %1333
  %1335 = vrot.lane.b32.xlu0 %v1224, 98
  %v1336 = vpop.permute.xlu0 %1335
  %v1337 = vsel %vm865, %v1334, %v1336
  %v1338 = vsel %vm865, %v1332, %v1334
  %v1339 = vsel %vm865, %v1330, %v1332
  %v1340 = vsel %vm865, %v1336, %v1330
  %v1341 = vmul.f32 %v1339, %v119
  %v1342 = vmul.f32 %v1338, %v120
  %v1343 = vmul.f32 %v1337, %v121
  %v1344 = vmul.f32 %v1340, %v122
  %1345 = vst [vmem:[#allocation2 + $0xc0] sm:$0xff] %v1341
  %1346 = vst [vmem:[#allocation2 + $0xc8] sm:$0xff] %v1342
  %1347 = vst [vmem:[#allocation2 + $0xd0] sm:$0xff] %v1343
  %1348 = vst [vmem:[#allocation2 + $0xd8] sm:$0xff] %v1344
  %1349 = vrot.lane.b32.xlu0 %v1221, 96
  %v1350 = vpop.permute.xlu0 %1349
  %1351 = vrot.lane.b32.xlu0 %v1222, 96
  %v1352 = vpop.permute.xlu0 %1351
  %1353 = vrot.lane.b32.xlu0 %v1223, 96
  %v1354 = vpop.permute.xlu0 %1353
  %1355 = vrot.lane.b32.xlu0 %v1224, 96
  %v1356 = vpop.permute.xlu0 %1355
  %v1357 = vsel %vm886, %v1354, %v1356
  %v1358 = vsel %vm886, %v1352, %v1354
  %v1359 = vsel %vm886, %v1350, %v1352
  %v1360 = vsel %vm886, %v1356, %v1350
  %v1361 = vmul.f32 %v1359, %v91
  %v1362 = vmul.f32 %v1358, %v92
  %v1363 = vmul.f32 %v1357, %v93
  %v1364 = vmul.f32 %v1360, %v94
  %1365 = vst [vmem:[#allocation2 + $0xe0] sm:$0xff] %v1361
  %1366 = vst [vmem:[#allocation2 + $0xe8] sm:$0xff] %v1362
  %1367 = vst [vmem:[#allocation2 + $0xf0] sm:$0xff] %v1363
  %1368 = vst [vmem:[#allocation2 + $0xf8] sm:$0xff] %v1364
  %1369 = vrot.lane.b32.xlu0 %v1221, 94
  %v1370 = vpop.permute.xlu0 %1369
  %1371 = vrot.lane.b32.xlu0 %v1222, 94
  %v1372 = vpop.permute.xlu0 %1371
  %1373 = vrot.lane.b32.xlu0 %v1223, 94
  %v1374 = vpop.permute.xlu0 %1373
  %1375 = vrot.lane.b32.xlu0 %v1224, 94
  %v1376 = vpop.permute.xlu0 %1375
  %v1377 = vsel %vm907, %v1374, %v1376
  %v1378 = vsel %vm907, %v1372, %v1374
  %v1379 = vsel %vm907, %v1370, %v1372
  %v1380 = vsel %vm907, %v1376, %v1370
  %v1381 = vmul.f32 %v1379, %v123
  %v1382 = vmul.f32 %v1378, %v124
  %v1383 = vmul.f32 %v1377, %v125
  %v1384 = vmul.f32 %v1380, %v126
  %1385 = vst [vmem:[#allocation2 + $0x100] sm:$0xff] %v1381
  %1386 = vst [vmem:[#allocation2 + $0x108] sm:$0xff] %v1382
  %1387 = vst [vmem:[#allocation2 + $0x110] sm:$0xff] %v1383
  %1388 = vst [vmem:[#allocation2 + $0x118] sm:$0xff] %v1384
  %v1389 = vld [vmem:[%s1 + $0x10] sm:$0xff]
  %v1390 = vld [vmem:[#allocation2] sm:$0xff]
  %v1391 = vld [vmem:[#allocation2 + $0x8] sm:$0xff]
  %v1392 = vld [vmem:[#allocation2 + $0x10] sm:$0xff]
  %v1393 = vld [vmem:[#allocation2 + $0x18] sm:$0xff]
  %v1394 = vld [vmem:[#allocation2 + $0x20] sm:$0xff]
  %v1395 = vld [vmem:[#allocation2 + $0x28] sm:$0xff]
  %v1396 = vld [vmem:[#allocation2 + $0x30] sm:$0xff]
  %v1397 = vld [vmem:[#allocation2 + $0x38] sm:$0xff]
  %v1398 = vld [vmem:[#allocation2 + $0x40] sm:$0xff]
  %v1399 = vld [vmem:[#allocation2 + $0x48] sm:$0xff]
  %v1400 = vld [vmem:[#allocation2 + $0x50] sm:$0xff]
  %v1401 = vld [vmem:[#allocation2 + $0x58] sm:$0xff]
  %v1402 = vld [vmem:[#allocation2 + $0x60] sm:$0xff]
  %v1403 = vld [vmem:[#allocation2 + $0x68] sm:$0xff]
  %v1404 = vld [vmem:[#allocation2 + $0x70] sm:$0xff]
  %v1405 = vld [vmem:[#allocation2 + $0x78] sm:$0xff]
  %v1406 = vld [vmem:[#allocation2 + $0x80] sm:$0xff]
  %v1407 = vld [vmem:[#allocation2 + $0x88] sm:$0xff]
  %v1408 = vld [vmem:[#allocation2 + $0x90] sm:$0xff]
  %v1409 = vld [vmem:[#allocation2 + $0x98] sm:$0xff]
  %v1410 = vld [vmem:[#allocation2 + $0xa0] sm:$0xff]
  %v1411 = vld [vmem:[#allocation2 + $0xa8] sm:$0xff]
  %v1412 = vld [vmem:[#allocation2 + $0xb0] sm:$0xff]
  %v1413 = vld [vmem:[#allocation2 + $0xb8] sm:$0xff]
  %v1414 = vld [vmem:[#allocation2 + $0xc0] sm:$0xff]
  %v1415 = vld [vmem:[#allocation2 + $0xc8] sm:$0xff]
  %v1416 = vld [vmem:[#allocation2 + $0xd0] sm:$0xff]
  %v1417 = vld [vmem:[#allocation2 + $0xd8] sm:$0xff]
  %v1418 = vld [vmem:[#allocation2 + $0xe0] sm:$0xff]
  %v1419 = vld [vmem:[#allocation2 + $0xe8] sm:$0xff]
  %v1420 = vld [vmem:[#allocation2 + $0xf0] sm:$0xff]
  %v1421 = vld [vmem:[#allocation2 + $0xf8] sm:$0xff]
  %v1422 = vld [vmem:[#allocation2 + $0x100] sm:$0xff]
  %v1423 = vld [vmem:[#allocation2 + $0x108] sm:$0xff]
  %v1424 = vld [vmem:[#allocation2 + $0x110] sm:$0xff]
  %v1425 = vld [vmem:[#allocation2 + $0x118] sm:$0xff]
  %v1426 = vld [vmem:[%s2] sm:$0xff]
  %1428 = vset.pattern.permute.xlu0 2
  %1429 = vperm.xlu0 %1428, %v1426
  %v1430 = vpop.permute.xlu0 %1429
  %v1433 = vsel %vm963, %v1389, 0
  %1435 = vmatprep.subr.mxu0 %v1391
  %1436 = vmatpush1.msra.mxu0 %v1390
  %1437 = vmatprep.subr.mxu0 %v1395
  %1438 = vmatpush1.msra.mxu0 %v1394
  %1439 = vmatprep.subr.mxu0 %v1399
  %1440 = vmatpush1.msra.mxu0 %v1398
  %1441 = vmatprep.subr.mxu0 %v1403
  %1442 = vmatpush1.msra.mxu0 %v1402
  %1443 = vmatprep.subr.mxu0 %v1407
  %1444 = vmatpush1.msra.mxu0 %v1406
  %1445 = vmatprep.subr.mxu0 %v1411
  %1446 = vmatpush1.msra.mxu0 %v1410
  %1447 = vmatprep.subr.mxu0 %v1415
  %1448 = vmatpush1.msra.mxu0 %v1414
  %1449 = vmatprep.subr.mxu0 %v1419
  %1450 = vmatpush1.msra.mxu0 %v1418
  %1451 = vmatprep.subr.mxu0 %v1423
  %1452 = vmatpush1.msra.mxu0 %v1422
  %1453 = vmatprep.subr.mxu0 0.0
  %1454 = vmatpush1.msra.mxu0 0.0
  %1455 = vmatprep.subr.mxu0 0.0
  %1456 = vmatpush1.msra.mxu0 0.0
  %1457 = vmatprep.subr.mxu0 0.0
  %1458 = vmatpush1.msra.mxu0 0.0
  %1459 = vmatprep.subr.mxu0 0.0
  %1460 = vmatpush1.msra.mxu0 0.0
  %1461 = vmatprep.subr.mxu0 0.0
  %1462 = vmatpush1.msra.mxu0 0.0
  %1463 = vmatprep.subr.mxu0 0.0
  %1464 = vmatpush1.msra.mxu0 0.0
  %1465 = vmatprep.subr.mxu0 0.0
  %1466 = vmatpush1.msra.mxu0 0.0
  %1467 = vmatprep.subr.mxu0 0.0
  %1468 = vmatpush1.msra.mxu0 0.0
  %1469 = vmatprep.subr.mxu0 0.0
  %1470 = vmatpush1.msra.mxu0 0.0
  %1471 = vmatprep.subr.mxu0 0.0
  %1472 = vmatpush1.msra.mxu0 0.0
  %1473 = vmatprep.subr.mxu0 0.0
  %1474 = vmatpush1.msra.mxu0 0.0
  %1475 = vmatprep.subr.mxu0 0.0
  %1476 = vmatpush1.msra.mxu0 0.0
  %1477 = vmatprep.subr.mxu0 0.0
  %1478 = vmatpush1.msra.mxu0 0.0
  %1479 = vmatprep.subr.mxu0 0.0
  %1480 = vmatpush1.msra.mxu0 0.0
  %1481 = vmatprep.subr.mxu0 0.0
  %1482 = vmatpush1.msra.mxu0 0.0
  %1483 = vmatprep.subr.mxu0 0.0
  %1484 = vmatpush1.msra.mxu0 0.0
  %1485 = vmatprep.subr.mxu0 0.0
  %1486 = vmatpush1.msra.mxu0 0.0
  %1487 = vmatprep.subr.mxu0 0.0
  %1488 = vmatpush1.msra.mxu0 0.0
  %1489 = vmatprep.subr.mxu0 0.0
  %1490 = vmatpush1.msra.mxu0 0.0
  %1491 = vmatprep.subr.mxu0 0.0
  %1492 = vmatpush1.msra.mxu0 0.0
  %1493 = vmatprep.subr.mxu0 0.0
  %1494 = vmatpush1.msra.mxu0 0.0
  %1495 = vmatprep.subr.mxu0 0.0
  %1496 = vmatpush1.msra.mxu0 0.0
  %1497 = vmatprep.subr.mxu0 0.0
  %1498 = vmatpush1.msra.mxu0 0.0
  %1499 = vmatprep.mubr.f32.mxu0 0.0
  %1500 = vmatmul.mubr.f32.gmra.mrb[0].mxu0 %v1433
  %v1501 = vpop.f32.mrb[0].mxu0
  %v1502 = vadd.f32 %v1430, %v1501
  %v1503 = vpop.f32.mrb[0].mxu0
  %v1504 = vadd.f32 %v1430, %v1503
  %1505 = vdwg.mxu0
  %1506 = vmatprep.subr.mxu0 %v1393
  %1507 = vmatpush1.msra.mxu0 %v1392
  %1508 = vmatprep.subr.mxu0 %v1397
  %1509 = vmatpush1.msra.mxu0 %v1396
  %1510 = vmatprep.subr.mxu0 %v1401
  %1511 = vmatpush1.msra.mxu0 %v1400
  %1512 = vmatprep.subr.mxu0 %v1405
  %1513 = vmatpush1.msra.mxu0 %v1404
  %1514 = vmatprep.subr.mxu0 %v1409
  %1515 = vmatpush1.msra.mxu0 %v1408
  %1516 = vmatprep.subr.mxu0 %v1413
  %1517 = vmatpush1.msra.mxu0 %v1412
  %1518 = vmatprep.subr.mxu0 %v1417
  %1519 = vmatpush1.msra.mxu0 %v1416
  %1520 = vmatprep.subr.mxu0 %v1421
  %1521 = vmatpush1.msra.mxu0 %v1420
  %1522 = vmatprep.subr.mxu0 %v1425
  %1523 = vmatpush1.msra.mxu0 %v1424
  %1524 = vmatprep.subr.mxu0 0.0
  %1525 = vmatpush1.msra.mxu0 0.0
  %1526 = vmatprep.subr.mxu0 0.0
  %1527 = vmatpush1.msra.mxu0 0.0
  %1528 = vmatprep.subr.mxu0 0.0
  %1529 = vmatpush1.msra.mxu0 0.0
  %1530 = vmatprep.subr.mxu0 0.0
  %1531 = vmatpush1.msra.mxu0 0.0
  %1532 = vmatprep.subr.mxu0 0.0
  %1533 = vmatpush1.msra.mxu0 0.0
  %1534 = vmatprep.subr.mxu0 0.0
  %1535 = vmatpush1.msra.mxu0 0.0
  %1536 = vmatprep.subr.mxu0 0.0
  %1537 = vmatpush1.msra.mxu0 0.0
  %1538 = vmatprep.subr.mxu0 0.0
  %1539 = vmatpush1.msra.mxu0 0.0
  %1540 = vmatprep.subr.mxu0 0.0
  %1541 = vmatpush1.msra.mxu0 0.0
  %1542 = vmatprep.subr.mxu0 0.0
  %1543 = vmatpush1.msra.mxu0 0.0
  %1544 = vmatprep.subr.mxu0 0.0
  %1545 = vmatpush1.msra.mxu0 0.0
  %1546 = vmatprep.subr.mxu0 0.0
  %1547 = vmatpush1.msra.mxu0 0.0
  %1548 = vmatprep.subr.mxu0 0.0
  %1549 = vmatpush1.msra.mxu0 0.0
  %1550 = vmatprep.subr.mxu0 0.0
  %1551 = vmatpush1.msra.mxu0 0.0
  %1552 = vmatprep.subr.mxu0 0.0
  %1553 = vmatpush1.msra.mxu0 0.0
  %1554 = vmatprep.subr.mxu0 0.0
  %1555 = vmatpush1.msra.mxu0 0.0
  %1556 = vmatprep.subr.mxu0 0.0
  %1557 = vmatpush1.msra.mxu0 0.0
  %1558 = vmatprep.subr.mxu0 0.0
  %1559 = vmatpush1.msra.mxu0 0.0
  %1560 = vmatprep.subr.mxu0 0.0
  %1561 = vmatpush1.msra.mxu0 0.0
  %1562 = vmatprep.subr.mxu0 0.0
  %1563 = vmatpush1.msra.mxu0 0.0
  %1564 = vmatprep.subr.mxu0 0.0
  %1565 = vmatpush1.msra.mxu0 0.0
  %1566 = vmatprep.subr.mxu0 0.0
  %1567 = vmatpush1.msra.mxu0 0.0
  %1568 = vmatprep.subr.mxu0 0.0
  %1569 = vmatpush1.msra.mxu0 0.0
  %1570 = vmatprep.mubr.f32.mxu0 0.0
  %1571 = vmatmul.mubr.f32.gmra.mrb[0].mxu0 %v1433
  %v1572 = vpop.f32.mrb[0].mxu0
  %v1573 = vadd.f32 %v1430, %v1572
  %v1574 = vpop.f32.mrb[0].mxu0
  %v1575 = vadd.f32 %v1430, %v1574
  %1576 = vdwg.mxu0
  %v1577 = vmax.f32 %v1502, 0.0
  %v1578 = vmax.f32 %v1504, 0.0
  %v1579 = vmax.f32 %v1573, 0.0
  %v1580 = vmax.f32 %v1575, 0.0
  %v1581 = vand.u32 %v27, 1
  %v1582 = vand.u32 %v28, 1
  %v1583 = vand.u32 %v29, 1
  %v1584 = vand.u32 %v30, 1
  %vm1585 = vcmp.ge.s32.totalorder %v1581, 1
  %vm1586 = vcmp.ge.s32.totalorder %v1582, 1
  %vm1587 = vcmp.ge.s32.totalorder %v1583, 1
  %vm1588 = vcmp.ge.s32.totalorder %v1584, 1
  %v1589 = vsel %vm1585, 1.0, 0.0
  %v1590 = vsel %vm1586, 1.0, 0.0
  %v1591 = vsel %vm1587, 1.0, 0.0
  %v1592 = vsel %vm1588, 1.0, 0.0
  %v1593 = vand.u32 %v23, 1
  %v1594 = vand.u32 %v24, 1
  %v1595 = vand.u32 %v25, 1
  %v1596 = vand.u32 %v26, 1
  %vm1597 = vcmp.ge.s32.totalorder %v1593, 1
  %vm1598 = vcmp.ge.s32.totalorder %v1594, 1
  %vm1599 = vcmp.ge.s32.totalorder %v1595, 1
  %vm1600 = vcmp.ge.s32.totalorder %v1596, 1
  %v1601 = vsel %vm1597, 1.0, 0.0
  %v1602 = vsel %vm1598, 1.0, 0.0
  %v1603 = vsel %vm1599, 1.0, 0.0
  %v1604 = vsel %vm1600, 1.0, 0.0
  %v1605 = vsub.f32 1.0, %v1589
  %v1606 = vsub.f32 1.0, %v1590
  %v1607 = vsub.f32 1.0, %v1591
  %v1608 = vsub.f32 1.0, %v1592
  %v1609 = vmul.f32 %v1577, %v1605
  %v1610 = vmul.f32 %v1578, %v1606
  %v1611 = vmul.f32 %v1579, %v1607
  %v1612 = vmul.f32 %v1580, %v1608
  %1613 = vrot.lane.b32.xlu0 %v1577, 1
  %v1614 = vpop.permute.xlu0 %1613
  %1615 = vrot.lane.b32.xlu0 %v1578, 1
  %v1616 = vpop.permute.xlu0 %1615
  %1617 = vrot.lane.b32.xlu0 %v1579, 1
  %v1618 = vpop.permute.xlu0 %1617
  %1619 = vrot.lane.b32.xlu0 %v1580, 1
  %v1620 = vpop.permute.xlu0 %1619
  %v1621 = vsel %vm311, %v1618, %v1620
  %v1622 = vsel %vm311, %v1616, %v1618
  %v1623 = vsel %vm311, %v1614, %v1616
  %v1624 = vsel %vm311, %v1620, %v1614
  %v1625 = vmul.f32 %v1624, %v1589
  %v1626 = vmul.f32 %v1623, %v1590
  %v1627 = vmul.f32 %v1622, %v1591
  %v1628 = vmul.f32 %v1621, %v1592
  %v1629 = vadd.f32 %v1609, %v1625
  %v1630 = vadd.f32 %v1610, %v1626
  %v1631 = vadd.f32 %v1611, %v1627
  %v1632 = vadd.f32 %v1612, %v1628
  %v1633 = vsub.f32 1.0, %v1601
  %v1634 = vsub.f32 1.0, %v1602
  %v1635 = vsub.f32 1.0, %v1603
  %v1636 = vsub.f32 1.0, %v1604
  %v1637 = vmul.f32 %v1629, %v1633
  %v1638 = vmul.f32 %v1630, %v1634
  %v1639 = vmul.f32 %v1631, %v1635
  %v1640 = vmul.f32 %v1632, %v1636
  %1641 = vrot.lane.b32.xlu0 %v1629, 16
  %v1642 = vpop.permute.xlu0 %1641
  %1643 = vrot.lane.b32.xlu0 %v1630, 16
  %v1644 = vpop.permute.xlu0 %1643
  %1645 = vrot.lane.b32.xlu0 %v1631, 16
  %v1646 = vpop.permute.xlu0 %1645
  %1647 = vrot.lane.b32.xlu0 %v1632, 16
  %v1648 = vpop.permute.xlu0 %1647
  %v1649 = vsel %vm213, %v1646, %v1648
  %v1650 = vsel %vm213, %v1644, %v1646
  %v1651 = vsel %vm213, %v1642, %v1644
  %v1652 = vsel %vm213, %v1648, %v1642
  %v1653 = vmul.f32 %v1652, %v1601
  %v1654 = vmul.f32 %v1651, %v1602
  %v1655 = vmul.f32 %v1650, %v1603
  %v1656 = vmul.f32 %v1649, %v1604
  %v1657 = vadd.f32 %v1637, %v1653
  %v1658 = vadd.f32 %v1638, %v1654
  %v1659 = vadd.f32 %v1639, %v1655
  %v1660 = vadd.f32 %v1640, %v1656
  %1661 = vrot.lane.b32.xlu0 %v1657, 17
  %v1662 = vpop.permute.xlu0 %1661
  %1663 = vrot.lane.b32.xlu0 %v1658, 17
  %v1664 = vpop.permute.xlu0 %1663
  %1665 = vrot.lane.b32.xlu0 %v1659, 17
  %v1666 = vpop.permute.xlu0 %1665
  %1667 = vrot.lane.b32.xlu0 %v1660, 17
  %v1668 = vpop.permute.xlu0 %1667
  %v1669 = vsel %vm161, %v1666, %v1668
  %v1670 = vsel %vm161, %v1664, %v1666
  %v1671 = vsel %vm161, %v1662, %v1664
  %v1672 = vsel %vm161, %v1668, %v1662
  %v1673 = vmul.f32 %v1672, %v63
  %v1674 = vmul.f32 %v1671, %v64
  %v1675 = vmul.f32 %v1670, %v65
  %v1676 = vmul.f32 %v1669, %v66
  %1677 = vst [vmem:[#allocation2] sm:$0xff] %v1673
  %1678 = vst [vmem:[#allocation2 + $0x8] sm:$0xff] %v1674
  %1679 = vst [vmem:[#allocation2 + $0x10] sm:$0xff] %v1675
  %1680 = vst [vmem:[#allocation2 + $0x18] sm:$0xff] %v1676
  %1681 = vrot.lane.b32.xlu0 %v1657, 16
  %v1682 = vpop.permute.xlu0 %1681
  %1683 = vrot.lane.b32.xlu0 %v1658, 16
  %v1684 = vpop.permute.xlu0 %1683
  %1685 = vrot.lane.b32.xlu0 %v1659, 16
  %v1686 = vpop.permute.xlu0 %1685
  %1687 = vrot.lane.b32.xlu0 %v1660, 16
  %v1688 = vpop.permute.xlu0 %1687
  %v1689 = vsel %vm213, %v1686, %v1688
  %v1690 = vsel %vm213, %v1684, %v1686
  %v1691 = vsel %vm213, %v1682, %v1684
  %v1692 = vsel %vm213, %v1688, %v1682
  %v1693 = vmul.f32 %v1692, %v35
  %v1694 = vmul.f32 %v1691, %v36
  %v1695 = vmul.f32 %v1690, %v37
  %v1696 = vmul.f32 %v1689, %v38
  %1697 = vst [vmem:[#allocation2 + $0x20] sm:$0xff] %v1693
  %1698 = vst [vmem:[#allocation2 + $0x28] sm:$0xff] %v1694
  %1699 = vst [vmem:[#allocation2 + $0x30] sm:$0xff] %v1695
  %1700 = vst [vmem:[#allocation2 + $0x38] sm:$0xff] %v1696
  %1701 = vrot.lane.b32.xlu0 %v1657, 15
  %v1702 = vpop.permute.xlu0 %1701
  %1703 = vrot.lane.b32.xlu0 %v1658, 15
  %v1704 = vpop.permute.xlu0 %1703
  %1705 = vrot.lane.b32.xlu0 %v1659, 15
  %v1706 = vpop.permute.xlu0 %1705
  %1707 = vrot.lane.b32.xlu0 %v1660, 15
  %v1708 = vpop.permute.xlu0 %1707
  %v1709 = vsel %vm262, %v1706, %v1708
  %v1710 = vsel %vm262, %v1704, %v1706
  %v1711 = vsel %vm262, %v1702, %v1704
  %v1712 = vsel %vm262, %v1708, %v1702
  %v1713 = vmul.f32 %v1712, %v67
  %v1714 = vmul.f32 %v1711, %v68
  %v1715 = vmul.f32 %v1710, %v69
  %v1716 = vmul.f32 %v1709, %v70
  %1717 = vst [vmem:[#allocation2 + $0x40] sm:$0xff] %v1713
  %1718 = vst [vmem:[#allocation2 + $0x48] sm:$0xff] %v1714
  %1719 = vst [vmem:[#allocation2 + $0x50] sm:$0xff] %v1715
  %1720 = vst [vmem:[#allocation2 + $0x58] sm:$0xff] %v1716
  %1721 = vrot.lane.b32.xlu0 %v1657, 1
  %v1722 = vpop.permute.xlu0 %1721
  %1723 = vrot.lane.b32.xlu0 %v1658, 1
  %v1724 = vpop.permute.xlu0 %1723
  %1725 = vrot.lane.b32.xlu0 %v1659, 1
  %v1726 = vpop.permute.xlu0 %1725
  %1727 = vrot.lane.b32.xlu0 %v1660, 1
  %v1728 = vpop.permute.xlu0 %1727
  %v1729 = vsel %vm311, %v1726, %v1728
  %v1730 = vsel %vm311, %v1724, %v1726
  %v1731 = vsel %vm311, %v1722, %v1724
  %v1732 = vsel %vm311, %v1728, %v1722
  %v1733 = vmul.f32 %v1732, %v51
  %v1734 = vmul.f32 %v1731, %v52
  %v1735 = vmul.f32 %v1730, %v53
  %v1736 = vmul.f32 %v1729, %v54
  %1737 = vst [vmem:[#allocation2 + $0x60] sm:$0xff] %v1733
  %1738 = vst [vmem:[#allocation2 + $0x68] sm:$0xff] %v1734
  %1739 = vst [vmem:[#allocation2 + $0x70] sm:$0xff] %v1735
  %1740 = vst [vmem:[#allocation2 + $0x78] sm:$0xff] %v1736
  %1741 = vst [vmem:[#allocation2 + $0x80] sm:$0xff] %v1657
  %1742 = vst [vmem:[#allocation2 + $0x88] sm:$0xff] %v1658
  %1743 = vst [vmem:[#allocation2 + $0x90] sm:$0xff] %v1659
  %1744 = vst [vmem:[#allocation2 + $0x98] sm:$0xff] %v1660
  %1745 = vrot.lane.b32.xlu0 %v1657, 127
  %v1746 = vpop.permute.xlu0 %1745
  %1747 = vrot.lane.b32.xlu0 %v1658, 127
  %v1748 = vpop.permute.xlu0 %1747
  %1749 = vrot.lane.b32.xlu0 %v1659, 127
  %v1750 = vpop.permute.xlu0 %1749
  %1751 = vrot.lane.b32.xlu0 %v1660, 127
  %v1752 = vpop.permute.xlu0 %1751
  %v1753 = vsel %vm363, %v1750, %v1752
  %v1754 = vsel %vm363, %v1748, %v1750
  %v1755 = vsel %vm363, %v1746, %v1748
  %v1756 = vsel %vm363, %v1752, %v1746
  %v1757 = vmul.f32 %v1755, %v59
  %v1758 = vmul.f32 %v1754, %v60
  %v1759 = vmul.f32 %v1753, %v61
  %v1760 = vmul.f32 %v1756, %v62
  %1761 = vst [vmem:[#allocation2 + $0xa0] sm:$0xff] %v1757
  %1762 = vst [vmem:[#allocation2 + $0xa8] sm:$0xff] %v1758
  %1763 = vst [vmem:[#allocation2 + $0xb0] sm:$0xff] %v1759
  %1764 = vst [vmem:[#allocation2 + $0xb8] sm:$0xff] %v1760
  %1765 = vrot.lane.b32.xlu0 %v1657, 113
  %v1766 = vpop.permute.xlu0 %1765
  %1767 = vrot.lane.b32.xlu0 %v1658, 113
  %v1768 = vpop.permute.xlu0 %1767
  %1769 = vrot.lane.b32.xlu0 %v1659, 113
  %v1770 = vpop.permute.xlu0 %1769
  %1771 = vrot.lane.b32.xlu0 %v1660, 113
  %v1772 = vpop.permute.xlu0 %1771
  %v1773 = vsel %vm412, %v1770, %v1772
  %v1774 = vsel %vm412, %v1768, %v1770
  %v1775 = vsel %vm412, %v1766, %v1768
  %v1776 = vsel %vm412, %v1772, %v1766
  %v1777 = vmul.f32 %v1775, %v71
  %v1778 = vmul.f32 %v1774, %v72
  %v1779 = vmul.f32 %v1773, %v73
  %v1780 = vmul.f32 %v1776, %v74
  %1781 = vst [vmem:[#allocation2 + $0xc0] sm:$0xff] %v1777
  %1782 = vst [vmem:[#allocation2 + $0xc8] sm:$0xff] %v1778
  %1783 = vst [vmem:[#allocation2 + $0xd0] sm:$0xff] %v1779
  %1784 = vst [vmem:[#allocation2 + $0xd8] sm:$0xff] %v1780
  %1785 = vrot.lane.b32.xlu0 %v1657, 112
  %v1786 = vpop.permute.xlu0 %1785
  %1787 = vrot.lane.b32.xlu0 %v1658, 112
  %v1788 = vpop.permute.xlu0 %1787
  %1789 = vrot.lane.b32.xlu0 %v1659, 112
  %v1790 = vpop.permute.xlu0 %1789
  %1791 = vrot.lane.b32.xlu0 %v1660, 112
  %v1792 = vpop.permute.xlu0 %1791
  %v1793 = vsel %vm461, %v1790, %v1792
  %v1794 = vsel %vm461, %v1788, %v1790
  %v1795 = vsel %vm461, %v1786, %v1788
  %v1796 = vsel %vm461, %v1792, %v1786
  %v1797 = vmul.f32 %v1795, %v43
  %v1798 = vmul.f32 %v1794, %v44
  %v1799 = vmul.f32 %v1793, %v45
  %v1800 = vmul.f32 %v1796, %v46
  %1801 = vst [vmem:[#allocation2 + $0xe0] sm:$0xff] %v1797
  %1802 = vst [vmem:[#allocation2 + $0xe8] sm:$0xff] %v1798
  %1803 = vst [vmem:[#allocation2 + $0xf0] sm:$0xff] %v1799
  %1804 = vst [vmem:[#allocation2 + $0xf8] sm:$0xff] %v1800
  %1805 = vrot.lane.b32.xlu0 %v1657, 111
  %v1806 = vpop.permute.xlu0 %1805
  %1807 = vrot.lane.b32.xlu0 %v1658, 111
  %v1808 = vpop.permute.xlu0 %1807
  %1809 = vrot.lane.b32.xlu0 %v1659, 111
  %v1810 = vpop.permute.xlu0 %1809
  %1811 = vrot.lane.b32.xlu0 %v1660, 111
  %v1812 = vpop.permute.xlu0 %1811
  %v1813 = vsel %vm510, %v1810, %v1812
  %v1814 = vsel %vm510, %v1808, %v1810
  %v1815 = vsel %vm510, %v1806, %v1808
  %v1816 = vsel %vm510, %v1812, %v1806
  %v1817 = vmul.f32 %v1815, %v75
  %v1818 = vmul.f32 %v1814, %v76
  %v1819 = vmul.f32 %v1813, %v77
  %v1820 = vmul.f32 %v1816, %v78
  %1821 = vst [vmem:[#allocation2 + $0x100] sm:$0xff] %v1817
  %1822 = vst [vmem:[#allocation2 + $0x108] sm:$0xff] %v1818
  %1823 = vst [vmem:[#allocation2 + $0x110] sm:$0xff] %v1819
  %1824 = vst [vmem:[#allocation2 + $0x118] sm:$0xff] %v1820
  %v1825 = vld [vmem:[%s1 + $0x18] sm:$0xff]
  %v1826 = vld [vmem:[#allocation2] sm:$0xff]
  %v1827 = vld [vmem:[#allocation2 + $0x8] sm:$0xff]
  %v1828 = vld [vmem:[#allocation2 + $0x10] sm:$0xff]
  %v1829 = vld [vmem:[#allocation2 + $0x18] sm:$0xff]
  %v1830 = vld [vmem:[#allocation2 + $0x20] sm:$0xff]
  %v1831 = vld [vmem:[#allocation2 + $0x28] sm:$0xff]
  %v1832 = vld [vmem:[#allocation2 + $0x30] sm:$0xff]
  %v1833 = vld [vmem:[#allocation2 + $0x38] sm:$0xff]
  %v1834 = vld [vmem:[#allocation2 + $0x40] sm:$0xff]
  %v1835 = vld [vmem:[#allocation2 + $0x48] sm:$0xff]
  %v1836 = vld [vmem:[#allocation2 + $0x50] sm:$0xff]
  %v1837 = vld [vmem:[#allocation2 + $0x58] sm:$0xff]
  %v1838 = vld [vmem:[#allocation2 + $0x60] sm:$0xff]
  %v1839 = vld [vmem:[#allocation2 + $0x68] sm:$0xff]
  %v1840 = vld [vmem:[#allocation2 + $0x70] sm:$0xff]
  %v1841 = vld [vmem:[#allocation2 + $0x78] sm:$0xff]
  %v1842 = vld [vmem:[#allocation2 + $0x80] sm:$0xff]
  %v1843 = vld [vmem:[#allocation2 + $0x88] sm:$0xff]
  %v1844 = vld [vmem:[#allocation2 + $0x90] sm:$0xff]
  %v1845 = vld [vmem:[#allocation2 + $0x98] sm:$0xff]
  %v1846 = vld [vmem:[#allocation2 + $0xa0] sm:$0xff]
  %v1847 = vld [vmem:[#allocation2 + $0xa8] sm:$0xff]
  %v1848 = vld [vmem:[#allocation2 + $0xb0] sm:$0xff]
  %v1849 = vld [vmem:[#allocation2 + $0xb8] sm:$0xff]
  %v1850 = vld [vmem:[#allocation2 + $0xc0] sm:$0xff]
  %v1851 = vld [vmem:[#allocation2 + $0xc8] sm:$0xff]
  %v1852 = vld [vmem:[#allocation2 + $0xd0] sm:$0xff]
  %v1853 = vld [vmem:[#allocation2 + $0xd8] sm:$0xff]
  %v1854 = vld [vmem:[#allocation2 + $0xe0] sm:$0xff]
  %v1855 = vld [vmem:[#allocation2 + $0xe8] sm:$0xff]
  %v1856 = vld [vmem:[#allocation2 + $0xf0] sm:$0xff]
  %v1857 = vld [vmem:[#allocation2 + $0xf8] sm:$0xff]
  %v1858 = vld [vmem:[#allocation2 + $0x100] sm:$0xff]
  %v1859 = vld [vmem:[#allocation2 + $0x108] sm:$0xff]
  %v1860 = vld [vmem:[#allocation2 + $0x110] sm:$0xff]
  %v1861 = vld [vmem:[#allocation2 + $0x118] sm:$0xff]
  %v1862 = vld [vmem:[%s2] sm:$0xff]
  %1864 = vset.pattern.permute.xlu0 3
  %1865 = vperm.xlu0 %1864, %v1862
  %v1866 = vpop.permute.xlu0 %1865
  %v1869 = vsel %vm963, %v1825, 0
  %1871 = vmatprep.subr.mxu0 %v1827
  %1872 = vmatpush1.msra.mxu0 %v1826
  %1873 = vmatprep.subr.mxu0 %v1831
  %1874 = vmatpush1.msra.mxu0 %v1830
  %1875 = vmatprep.subr.mxu0 %v1835
  %1876 = vmatpush1.msra.mxu0 %v1834
  %1877 = vmatprep.subr.mxu0 %v1839
  %1878 = vmatpush1.msra.mxu0 %v1838
  %1879 = vmatprep.subr.mxu0 %v1843
  %1880 = vmatpush1.msra.mxu0 %v1842
  %1881 = vmatprep.subr.mxu0 %v1847
  %1882 = vmatpush1.msra.mxu0 %v1846
  %1883 = vmatprep.subr.mxu0 %v1851
  %1884 = vmatpush1.msra.mxu0 %v1850
  %1885 = vmatprep.subr.mxu0 %v1855
  %1886 = vmatpush1.msra.mxu0 %v1854
  %1887 = vmatprep.subr.mxu0 %v1859
  %1888 = vmatpush1.msra.mxu0 %v1858
  %1889 = vmatprep.subr.mxu0 0.0
  %1890 = vmatpush1.msra.mxu0 0.0
  %1891 = vmatprep.subr.mxu0 0.0
  %1892 = vmatpush1.msra.mxu0 0.0
  %1893 = vmatprep.subr.mxu0 0.0
  %1894 = vmatpush1.msra.mxu0 0.0
  %1895 = vmatprep.subr.mxu0 0.0
  %1896 = vmatpush1.msra.mxu0 0.0
  %1897 = vmatprep.subr.mxu0 0.0
  %1898 = vmatpush1.msra.mxu0 0.0
  %1899 = vmatprep.subr.mxu0 0.0
  %1900 = vmatpush1.msra.mxu0 0.0
  %1901 = vmatprep.subr.mxu0 0.0
  %1902 = vmatpush1.msra.mxu0 0.0
  %1903 = vmatprep.subr.mxu0 0.0
  %1904 = vmatpush1.msra.mxu0 0.0
  %1905 = vmatprep.subr.mxu0 0.0
  %1906 = vmatpush1.msra.mxu0 0.0
  %1907 = vmatprep.subr.mxu0 0.0
  %1908 = vmatpush1.msra.mxu0 0.0
  %1909 = vmatprep.subr.mxu0 0.0
  %1910 = vmatpush1.msra.mxu0 0.0
  %1911 = vmatprep.subr.mxu0 0.0
  %1912 = vmatpush1.msra.mxu0 0.0
  %1913 = vmatprep.subr.mxu0 0.0
  %1914 = vmatpush1.msra.mxu0 0.0
  %1915 = vmatprep.subr.mxu0 0.0
  %1916 = vmatpush1.msra.mxu0 0.0
  %1917 = vmatprep.subr.mxu0 0.0
  %1918 = vmatpush1.msra.mxu0 0.0
  %1919 = vmatprep.subr.mxu0 0.0
  %1920 = vmatpush1.msra.mxu0 0.0
  %1921 = vmatprep.subr.mxu0 0.0
  %1922 = vmatpush1.msra.mxu0 0.0
  %1923 = vmatprep.subr.mxu0 0.0
  %1924 = vmatpush1.msra.mxu0 0.0
  %1925 = vmatprep.subr.mxu0 0.0
  %1926 = vmatpush1.msra.mxu0 0.0
  %1927 = vmatprep.subr.mxu0 0.0
  %1928 = vmatpush1.msra.mxu0 0.0
  %1929 = vmatprep.subr.mxu0 0.0
  %1930 = vmatpush1.msra.mxu0 0.0
  %1931 = vmatprep.subr.mxu0 0.0
  %1932 = vmatpush1.msra.mxu0 0.0
  %1933 = vmatprep.subr.mxu0 0.0
  %1934 = vmatpush1.msra.mxu0 0.0
  %1935 = vmatprep.mubr.f32.mxu0 0.0
  %1936 = vmatmul.mubr.f32.gmra.mrb[0].mxu0 %v1869
  %v1937 = vpop.f32.mrb[0].mxu0
  %v1938 = vadd.f32 %v1866, %v1937
  %v1939 = vpop.f32.mrb[0].mxu0
  %v1940 = vadd.f32 %v1866, %v1939
  %1941 = vdwg.mxu0
  %1942 = vmatprep.subr.mxu0 %v1829
  %1943 = vmatpush1.msra.mxu0 %v1828
  %1944 = vmatprep.subr.mxu0 %v1833
  %1945 = vmatpush1.msra.mxu0 %v1832
  %1946 = vmatprep.subr.mxu0 %v1837
  %1947 = vmatpush1.msra.mxu0 %v1836
  %1948 = vmatprep.subr.mxu0 %v1841
  %1949 = vmatpush1.msra.mxu0 %v1840
  %1950 = vmatprep.subr.mxu0 %v1845
  %1951 = vmatpush1.msra.mxu0 %v1844
  %1952 = vmatprep.subr.mxu0 %v1849
  %1953 = vmatpush1.msra.mxu0 %v1848
  %1954 = vmatprep.subr.mxu0 %v1853
  %1955 = vmatpush1.msra.mxu0 %v1852
  %1956 = vmatprep.subr.mxu0 %v1857
  %1957 = vmatpush1.msra.mxu0 %v1856
  %1958 = vmatprep.subr.mxu0 %v1861
  %1959 = vmatpush1.msra.mxu0 %v1860
  %1960 = vmatprep.subr.mxu0 0.0
  %1961 = vmatpush1.msra.mxu0 0.0
  %1962 = vmatprep.subr.mxu0 0.0
  %1963 = vmatpush1.msra.mxu0 0.0
  %1964 = vmatprep.subr.mxu0 0.0
  %1965 = vmatpush1.msra.mxu0 0.0
  %1966 = vmatprep.subr.mxu0 0.0
  %1967 = vmatpush1.msra.mxu0 0.0
  %1968 = vmatprep.subr.mxu0 0.0
  %1969 = vmatpush1.msra.mxu0 0.0
  %1970 = vmatprep.subr.mxu0 0.0
  %1971 = vmatpush1.msra.mxu0 0.0
  %1972 = vmatprep.subr.mxu0 0.0
  %1973 = vmatpush1.msra.mxu0 0.0
  %1974 = vmatprep.subr.mxu0 0.0
  %1975 = vmatpush1.msra.mxu0 0.0
  %1976 = vmatprep.subr.mxu0 0.0
  %1977 = vmatpush1.msra.mxu0 0.0
  %1978 = vmatprep.subr.mxu0 0.0
  %1979 = vmatpush1.msra.mxu0 0.0
  %1980 = vmatprep.subr.mxu0 0.0
  %1981 = vmatpush1.msra.mxu0 0.0
  %1982 = vmatprep.subr.mxu0 0.0
  %1983 = vmatpush1.msra.mxu0 0.0
  %1984 = vmatprep.subr.mxu0 0.0
  %1985 = vmatpush1.msra.mxu0 0.0
  %1986 = vmatprep.subr.mxu0 0.0
  %1987 = vmatpush1.msra.mxu0 0.0
  %1988 = vmatprep.subr.mxu0 0.0
  %1989 = vmatpush1.msra.mxu0 0.0
  %1990 = vmatprep.subr.mxu0 0.0
  %1991 = vmatpush1.msra.mxu0 0.0
  %1992 = vmatprep.subr.mxu0 0.0
  %1993 = vmatpush1.msra.mxu0 0.0
  %1994 = vmatprep.subr.mxu0 0.0
  %1995 = vmatpush1.msra.mxu0 0.0
  %1996 = vmatprep.subr.mxu0 0.0
  %1997 = vmatpush1.msra.mxu0 0.0
  %1998 = vmatprep.subr.mxu0 0.0
  %1999 = vmatpush1.msra.mxu0 0.0
  %2000 = vmatprep.subr.mxu0 0.0
  %2001 = vmatpush1.msra.mxu0 0.0
  %2002 = vmatprep.subr.mxu0 0.0
  %2003 = vmatpush1.msra.mxu0 0.0
  %2004 = vmatprep.subr.mxu0 0.0
  %2005 = vmatpush1.msra.mxu0 0.0
  %2006 = vmatprep.mubr.f32.mxu0 0.0
  %2007 = vmatmul.mubr.f32.gmra.mrb[0].mxu0 %v1869
  %v2008 = vpop.f32.mrb[0].mxu0
  %v2009 = vadd.f32 %v1866, %v2008
  %v2010 = vpop.f32.mrb[0].mxu0
  %v2011 = vadd.f32 %v1866, %v2010
  %2012 = vdwg.mxu0
  %v2017 = vcombine.low %v1938, %v1940
  %v2018 = vcombine.low %v2009, %v2011
  %v2020 = vunpack.c.l.s4 1966171168
  %v2021 = vunpack.c.0.s8 %v2020
  %v2022 = vlaneseq
  %v2023 = vshrl.u32 %v2022, 7
  %v2024 = vsub.s32 %v2021, %v2023
  %v2025 = vrot.slane %v2017, %v2024
  %v2027 = vunpack.c.l.s4 1966171168
  %v2028 = vunpack.c.0.s8 %v2027
  %v2029 = vlaneseq
  %v2030 = vshrl.u32 %v2029, 7
  %v2031 = vsub.s32 %v2028, %v2030
  %v2032 = vrot.slane %v2018, %v2031
  %v2033 = vcombine.low %v2025, %v2032
  %v2035 = vunpack.c.l.s4 1966171168
  %v2036 = vunpack.c.0.s8 %v2035
  %v2037 = vlaneseq
  %v2038 = vshrl.u32 %v2037, 7
  %v2039 = vsub.s32 %v2036, %v2038
  %v2040 = vrot.slane %v2033, %v2039
  %2042 = vst.msk [vmem:[%s3] sm:$0xf] %vm202, %v2040
  // Predicated region
  $region14: #{cnn_encoder_forward.1} parent=0 // pred_check
    _
  $region15: #{cnn_encoder_forward.1} parent=0 // pred_check_branch
    %2044 = sbr.rel (0) target = $region17
  $region16: #{cnn_encoder_forward.1} parent=0 // pred_region
    _
  $region17: #{cnn_encoder_forward.1} parent=0 // pred_fallthru
    _
  // Predicated region
  $region18: #{cnn_encoder_forward.1} parent=0 // pred_check
    _
  $region19: #{cnn_encoder_forward.1} parent=0 // pred_check_branch
    %2046 = sbr.rel (0) target = $region21
  $region20: #{cnn_encoder_forward.1} parent=0 // pred_region
    _
  $region21: #{cnn_encoder_forward.1} parent=0 // pred_fallthru
    _

</llo_original>
